<compile_context>
chip_gen: v5e
topology: v5e:2x2
jax: 0.10.0
libtpu: 0.0.40
codegen_flags: <defaults>
</compile_context>

<pallas_src>
import functools
import math

import jax
import jax.numpy as jnp
from jax.experimental import pallas as pl
from jax.experimental.pallas import tpu as pltpu


# ----------------------------------------------------------------------------
# Fused Pallas kernel: BN1+ReLU -> 3x3 conv -> BN2+ReLU -> 1x1 conv (+bias)
# ----------------------------------------------------------------------------
def _segmenthead_kernel(x_ref, w1_ref, s1_ref, b1_ref, s2_ref, b2_ref,
                        w2_ref, c2b_ref, o_ref, *, mm_dtype):
    H, W, Cin = x_ref.shape[1], x_ref.shape[2], x_ref.shape[3]
    TH = o_ref.shape[1]                       # row-tile height (divides H)

    rt = pl.program_id(1)
    row0 = pl.multiple_of(rt * TH, TH)

    s1 = s1_ref[...].reshape(1, 1, Cin)
    b1 = b1_ref[...].reshape(1, 1, Cin)

    def bn1_relu(rows):
        # f32 epilogue (v5e has no bf16 VPU); cast to the matmul dtype *before*
        # the im2col concat so the lane relayout moves bf16, not f32.
        return jnp.maximum(rows.astype(jnp.float32) * s1 + b1, 0.0).astype(mm_dtype)

    # Interior rows of this tile.  The full image block is VMEM-resident per
    # batch element and revisited across the row-tile grid axis -> single DMA.
    mid = bn1_relu(x_ref[0, pl.ds(row0, TH), :, :])               # (TH, W, Cin)

    # 1-row top/bottom halo.  conv1 zero-pads relu(bn1(x)) spatially, so halo
    # rows outside the image are zero; the clamp keeps the VMEM read in-bounds.
    top = bn1_relu(x_ref[0, pl.ds(jnp.maximum(row0 - 1, 0), 1), :, :])
    top = jnp.where(row0 == 0, jnp.zeros_like(top), top)
    bot = bn1_relu(x_ref[0, pl.ds(jnp.minimum(row0 + TH, H - 1), 1), :, :])
    bot = jnp.where(row0 + TH == H, jnp.zeros_like(bot), bot)

    a = jnp.concatenate([top, mid, bot], axis=0)                  # (TH+2, W, Cin)

    # im2col: 9 shifted views (column halo via a zero column) -> one
    # (TH*W, 9*Cin) slab -> a single K = 9*Cin MXU matmul.
    zcol = jnp.zeros((TH, 1, Cin), mm_dtype)
    taps = []
    for ky in range(3):
        rows = a[ky:ky + TH, :, :]
        taps.append(jnp.concatenate([zcol, rows[:, :W - 1, :]], axis=1))  # kx = 0
        taps.append(rows)                                                 # kx = 1
        taps.append(jnp.concatenate([rows[:, 1:, :], zcol], axis=1))      # kx = 2
    patches = jnp.concatenate(taps, axis=-1).reshape(TH * W, 9 * Cin)

    acc = jnp.dot(patches, w1_ref[...],
                  preferred_element_type=jnp.float32)             # (TH*W, Cmid_p)

    # Fused BN2 + ReLU epilogue (f32), then the 1x1 conv2 (+bias) as a second
    # MXU matmul — the intermediate activation never leaves VMEM.
    t = jnp.maximum(acc * s2_ref[...] + b2_ref[...], 0.0)
    out = jnp.dot(t.astype(mm_dtype), w2_ref[...],
                  preferred_element_type=jnp.float32) + c2b_ref[...]   # (TH*W, Cout)

    o_ref[...] = out.reshape(1, TH, W, out.shape[-1]).astype(o_ref.dtype)


# ----------------------------------------------------------------------------
# Wrapper helpers
# ----------------------------------------------------------------------------
def _round_up(x, m):
    return (x + m - 1) // m * m


def _pick_tile_rows(h, w, n):
    """Row-tile height: divisor of h, targets M = th*w ~ 1024 per matmul while
    keeping >= 4 grid steps (pipeline depth / both v7x TensorCores)."""
    divisors = [d for d in range(1, h + 1) if h % d == 0]

    def score(th):
        m = th * w
        steps = n * (h // th)
        s = abs(math.log2(m) - 10.0)              # prefer M ~ 1024
        if steps < 4:
            s += 2.0 * (4 - steps)                # keep grid parallelism
        if m > 8192:
            s += 2.0 * (math.log2(m) - 13.0)      # VMEM guard for huge tiles
        return s

    return min(divisors, key=score)


def _vmem_limit_bytes():
    try:
        cap = pltpu.get_tpu_info().vmem_capacity_bytes
    except Exception:
        cap = 128 * 1024 * 1024
    # ~48 MiB on v7x (64 MiB/TC), ~96 MiB on v5e/v6e (128 MiB).
    return int(min(96 * 1024 * 1024, (cap * 3) // 4))


def bilinear_resize_nchw(x, out_h, out_w):
    """F.interpolate(mode='bilinear', align_corners=False) for NCHW (plain JAX glue)."""
    _, _, h, w = x.shape

    def interp_1d(in_size, out_size):
        o = jnp.arange(out_size, dtype=jnp.float32)
        src = (o + 0.5) * (in_size / out_size) - 0.5
        src = jnp.clip(src, 0.0, float(in_size - 1))
        i0 = jnp.floor(src).astype(jnp.int32)
        i1 = jnp.minimum(i0 + 1, in_size - 1)
        return i0, i1, src - i0.astype(jnp.float32)

    r0, r1, rf = interp_1d(h, out_h)
    c0, c1, cf = interp_1d(w, out_w)
    rf = rf[None, None, :, None]
    cf = cf[None, None, None, :]
    xr = x[:, :, r0, :] * (1.0 - rf) + x[:, :, r1, :] * rf
    return xr[:, :, :, c0] * (1.0 - cf) + xr[:, :, :, c1] * cf


# ----------------------------------------------------------------------------
# Forward
# ----------------------------------------------------------------------------
def segmenthead_forward(x_nchw, params, *, scale_factor=None, mm_dtype=jnp.bfloat16):
    n, cin, h, w = x_nchw.shape
    s1, b1 = params["bn1"]
    w1 = params["conv1_w"]              # (3, 3, Cin, Cmid)  HWIO
    s2, b2 = params["bn2"]
    w2 = params["conv2_w"]              # (Cmid, Cout)
    c2b = params["conv2_b"]             # (Cout,)
    cmid, cout = w2.shape

    is_bf16 = jnp.dtype(mm_dtype) == jnp.dtype(jnp.bfloat16)
    store_dtype = jnp.bfloat16 if is_bf16 else jnp.float32

    cmid_p = _round_up(cmid, 128)       # lane-dense intermediate channels
    th = _pick_tile_rows(h, w, n)
    n_rt = h // th

    # Single pre-kernel HBM pass: NCHW -> NHWC + dtype cast (no spatial pad —
    # the conv halo is built inside the kernel).
    x_nhwc = jnp.transpose(x_nchw, (0, 2, 3, 1)).astype(store_dtype)

    # Matmul-dtype / channel-padded parameters (padding is a math no-op).
    w1_k = jnp.pad(w1.reshape(9 * cin, cmid),
                   ((0, 0), (0, cmid_p - cmid))).astype(mm_dtype)
    s1_k = s1.reshape(1, cin).astype(jnp.float32)
    b1_k = b1.reshape(1, cin).astype(jnp.float32)
    s2_k = jnp.pad(s2, (0, cmid_p - cmid)).reshape(1, cmid_p).astype(jnp.float32)
    b2_k = jnp.pad(b2, (0, cmid_p - cmid)).reshape(1, cmid_p).astype(jnp.float32)
    w2_k = jnp.pad(w2, ((0, cmid_p - cmid), (0, 0))).astype(mm_dtype)   # (Cmid_p, Cout)
    c2b_k = c2b.reshape(1, cout).astype(jnp.float32)

    act_bytes = jnp.dtype(store_dtype).itemsize
    w_bytes = jnp.dtype(mm_dtype).itemsize
    flops = 2 * n * h * w * (9 * cin * cmid_p + cmid_p * cout)
    bytes_accessed = (x_nhwc.size * act_bytes
                      + (w1_k.size + w2_k.size) * w_bytes
                      + n * h * w * cout * act_bytes)

    out_nhwc = pl.pallas_call(
        functools.partial(_segmenthead_kernel, mm_dtype=mm_dtype),
        out_shape=jax.ShapeDtypeStruct((n, h, w, cout), store_dtype),
        grid=(n, n_rt),
        in_specs=[
            pl.BlockSpec((1, h, w, cin), lambda i, r: (i, 0, 0, 0)),
            pl.BlockSpec((9 * cin, cmid_p), lambda i, r: (0, 0)),
            pl.BlockSpec((1, cin), lambda i, r: (0, 0)),
            pl.BlockSpec((1, cin), lambda i, r: (0, 0)),
            pl.BlockSpec((1, cmid_p), lambda i, r: (0, 0)),
            pl.BlockSpec((1, cmid_p), lambda i, r: (0, 0)),
            pl.BlockSpec((cmid_p, cout), lambda i, r: (0, 0)),
            pl.BlockSpec((1, cout), lambda i, r: (0, 0)),
        ],
        out_specs=pl.BlockSpec((1, th, w, cout), lambda i, r: (i, r, 0, 0)),
        compiler_params=pltpu.CompilerParams(
            dimension_semantics=("parallel", "parallel"),
            vmem_limit_bytes=_vmem_limit_bytes()),
        cost_estimate=pl.CostEstimate(flops=flops, transcendentals=0,
                                      bytes_accessed=bytes_accessed),
    )(x_nhwc, w1_k, s1_k, b1_k, s2_k, b2_k, w2_k, c2b_k)

    out = jnp.transpose(out_nhwc, (0, 3, 1, 2)).astype(jnp.float32)   # -> NCHW
    if scale_factor is not None:
        out = bilinear_resize_nchw(out, h * scale_factor, w * scale_factor)
    return out


# ----------------------------------------------------------------------------
# Deterministic synthetic parameters (eval-mode folded BatchNorm)
# ----------------------------------------------------------------------------
def init_params(key, cin, cmid, cout, eps=1e-5):
    k = jax.random.split(key, 11)

    def folded_bn(kg, kb, km, kv, c):
        gamma = 1.0 + 0.1 * jax.random.normal(kg, (c,), jnp.float32)
        beta = 0.1 * jax.random.normal(kb, (c,), jnp.float32)
        mean = 0.1 * jax.random.normal(km, (c,), jnp.float32)
        var = jnp.abs(jax.random.normal(kv, (c,), jnp.float32)) + 0.5
        scale = gamma / jnp.sqrt(var + eps)
        return scale, beta - mean * scale

    conv1_w = jax.random.normal(k[8], (3, 3, cin, cmid), jnp.float32) / jnp.sqrt(9.0 * cin)
    conv2_w = jax.random.normal(k[9], (cmid, cout), jnp.float32) / jnp.sqrt(float(cmid))
    conv2_b = 0.1 * jax.random.normal(k[10], (cout,), jnp.float32)
    return {"bn1": folded_bn(k[0], k[1], k[2], k[3], cin),
            "conv1_w": conv1_w,
            "bn2": folded_bn(k[4], k[5], k[6], k[7], cmid),
            "conv2_w": conv2_w,
            "conv2_b": conv2_b}


# ----------------------------------------------------------------------------
# Pure-JAX reference (mirrors the kernel's storage / matmul dtypes)
# ----------------------------------------------------------------------------
def segmenthead_ref(x_nchw, params, *, scale_factor=None, mm_dtype=jnp.float32):
    s1, b1 = params["bn1"]
    w1 = params["conv1_w"]
    s2, b2 = params["bn2"]
    w2 = params["conv2_w"]
    c2b = params["conv2_b"]
    h, w = x_nchw.shape[2], x_nchw.shape[3]

    is_bf16 = jnp.dtype(mm_dtype) == jnp.dtype(jnp.bfloat16)
    store_dtype = jnp.bfloat16 if is_bf16 else jnp.float32

    x_nhwc = jnp.transpose(x_nchw, (0, 2, 3, 1)).astype(store_dtype).astype(jnp.float32)
    a = jnp.maximum(x_nhwc * s1 + b1, 0.0).astype(mm_dtype)
    y = jax.lax.conv_general_dilated(
        a, w1.astype(mm_dtype), window_strides=(1, 1), padding="SAME",
        dimension_numbers=("NHWC", "HWIO", "NHWC"),
        preferred_element_type=jnp.float32)
    t = jnp.maximum(y * s2 + b2, 0.0)
    out = jax.lax.dot_general(t.astype(mm_dtype), w2.astype(mm_dtype),
                              (((3,), (0,)), ((), ())),
                              preferred_element_type=jnp.float32) + c2b
    out = out.astype(store_dtype).astype(jnp.float32)
    out = jnp.transpose(out, (0, 3, 1, 2))
    if scale_factor is not None:
        out = bilinear_resize_nchw(out, h * scale_factor, w * scale_factor)
    return out


# ----------------------------------------------------------------------------
if __name__ == "__main__":
    # segmenthead(inplanes=16, interplanes=32, outplanes=8, scale_factor=2)
    N, CIN, CMID, COUT = 2, 16, 32, 8
    H, W = 16, 16
    SCALE = 2

    root = jax.random.PRNGKey(0)
    kx, kp = jax.random.split(root)
    x = jax.random.normal(kx, (N, CIN, H, W), jnp.float32)
    params = init_params(kp, CIN, CMID, COUT)

    # 1) f32 matmul path: tight correctness check.
    fwd_f32 = jax.jit(functools.partial(segmenthead_forward, scale_factor=SCALE,
                                        mm_dtype=jnp.float32))
    out_f32 = jax.block_until_ready(fwd_f32(x, params))
    assert out_f32.shape == (N, COUT, H * SCALE, W * SCALE), out_f32.shape
    ref_f32 = jax.block_until_ready(
        segmenthead_ref(x, params, scale_factor=SCALE, mm_dtype=jnp.float32))
    err_f32 = float(jnp.max(jnp.abs(out_f32 - ref_f32)))
    assert jnp.allclose(out_f32, ref_f32, rtol=1e-4, atol=1e-4), err_f32

    # 2) bf16 I/O + bf16 MXU perf path (v5e/v6e/v7x), checked against a
    #    dtype-mirrored reference; tolerance sized for bf16 rounding only.
    fwd_bf16 = jax.jit(functools.partial(segmenthead_forward, scale_factor=SCALE,
                                         mm_dtype=jnp.bfloat16))
    out_bf16 = jax.block_until_ready(fwd_bf16(x, params))
    assert out_bf16.shape == (N, COUT, H * SCALE, W * SCALE), out_bf16.shape
    ref_bf16 = jax.block_until_ready(
        segmenthead_ref(x, params, scale_factor=SCALE, mm_dtype=jnp.bfloat16))
    err_bf16 = float(jnp.max(jnp.abs(out_bf16 - ref_bf16)))
    assert jnp.allclose(out_bf16, ref_bf16, rtol=2e-2, atol=2e-2), err_bf16

    print("KERNEL_OK")
</pallas_src>

<mosaic_0001>
module attributes {stable_mosaic.version = 11 : i64} {
  func.func @_segmenthead_kernel(%arg0: i32, %arg1: i32, %arg2: memref<1x16x16x16xf32, #tpu.memory_space<vmem>>, %arg3: memref<144x128xf32, #tpu.memory_space<vmem>>, %arg4: memref<1x16xf32, #tpu.memory_space<vmem>>, %arg5: memref<1x16xf32, #tpu.memory_space<vmem>>, %arg6: memref<1x128xf32, #tpu.memory_space<vmem>>, %arg7: memref<1x128xf32, #tpu.memory_space<vmem>>, %arg8: memref<128x8xf32, #tpu.memory_space<vmem>>, %arg9: memref<1x8xf32, #tpu.memory_space<vmem>>, %arg10: memref<1x8x16x8xf32, #tpu.memory_space<vmem>>) attributes {dimension_semantics = [#tpu.dimension_semantics<parallel>, #tpu.dimension_semantics<parallel>], iteration_bounds = array<i64: 2, 2>, scalar_prefetch = 0 : i64, scratch_operands = 0 : i64, tpu.core_type = #tpu.core_type<tc>, window_params = [{transform_indices = @transform_0, window_bounds = array<i64: 1, 16, 16, 16>}, {pipeline_mode = #tpu.pipeline_mode<synchronous>, transform_indices = @transform_1, window_bounds = array<i64: 144, 128>}, {pipeline_mode = #tpu.pipeline_mode<synchronous>, transform_indices = @transform_2, window_bounds = array<i64: 1, 16>}, {pipeline_mode = #tpu.pipeline_mode<synchronous>, transform_indices = @transform_3, window_bounds = array<i64: 1, 16>}, {pipeline_mode = #tpu.pipeline_mode<synchronous>, transform_indices = @transform_4, window_bounds = array<i64: 1, 128>}, {pipeline_mode = #tpu.pipeline_mode<synchronous>, transform_indices = @transform_5, window_bounds = array<i64: 1, 128>}, {pipeline_mode = #tpu.pipeline_mode<synchronous>, transform_indices = @transform_6, window_bounds = array<i64: 128, 8>}, {pipeline_mode = #tpu.pipeline_mode<synchronous>, transform_indices = @transform_7, window_bounds = array<i64: 1, 8>}, {transform_indices = @transform_8, window_bounds = array<i64: 1, 8, 16, 8>}]} {
    %c8_i32 = arith.constant 8 : i32
    %0 = arith.muli %arg1, %c8_i32 : i32
    %1 = tpu.assume_multiple %0, 8 : i32
    %c0 = arith.constant 0 : index
    %c0_0 = arith.constant 0 : index
    %2 = vector.load %arg4[%c0, %c0_0] : memref<1x16xf32, #tpu.memory_space<vmem>>, vector<1x16xf32>
    %3 = vector.shape_cast %2 : vector<1x16xf32> to vector<1x1x16xf32>
    %c0_1 = arith.constant 0 : index
    %c0_2 = arith.constant 0 : index
    %4 = vector.load %arg5[%c0_1, %c0_2] : memref<1x16xf32, #tpu.memory_space<vmem>>, vector<1x16xf32>
    %5 = vector.shape_cast %4 : vector<1x16xf32> to vector<1x1x16xf32>
    %c0_3 = arith.constant 0 : index
    %6 = arith.index_cast %1 : i32 to index
    %c0_4 = arith.constant 0 : index
    %c0_5 = arith.constant 0 : index
    %7 = vector.load %arg2[%c0_3, %6, %c0_4, %c0_5] : memref<1x16x16x16xf32, #tpu.memory_space<vmem>>, vector<1x8x16x16xf32>
    %8 = vector.shape_cast %7 : vector<1x8x16x16xf32> to vector<8x16x16xf32>
    %9 = vector.broadcast %3 : vector<1x1x16xf32> to vector<8x16x16xf32>
    %10 = arith.mulf %8, %9 : vector<8x16x16xf32>
    %11 = vector.broadcast %5 : vector<1x1x16xf32> to vector<8x16x16xf32>
    %12 = arith.addf %10, %11 : vector<8x16x16xf32>
    %cst = arith.constant 0.000000e+00 : f32
    %13 = vector.broadcast %cst : f32 to vector<8x16x16xf32>
    %14 = arith.maximumf %12, %13 : vector<8x16x16xf32>
    %c1_i32 = arith.constant 1 : i32
    %15 = arith.subi %1, %c1_i32 : i32
    %c0_i32 = arith.constant 0 : i32
    %16 = arith.maxsi %15, %c0_i32 : i32
    %c0_6 = arith.constant 0 : index
    %17 = arith.index_cast %16 : i32 to index
    %c0_7 = arith.constant 0 : index
    %c0_8 = arith.constant 0 : index
    %18 = vector.load %arg2[%c0_6, %17, %c0_7, %c0_8] : memref<1x16x16x16xf32, #tpu.memory_space<vmem>>, vector<1x1x16x16xf32>
    %19 = vector.shape_cast %18 : vector<1x1x16x16xf32> to vector<1x16x16xf32>
    %20 = vector.broadcast %3 : vector<1x1x16xf32> to vector<1x16x16xf32>
    %21 = arith.mulf %19, %20 : vector<1x16x16xf32>
    %22 = vector.broadcast %5 : vector<1x1x16xf32> to vector<1x16x16xf32>
    %23 = arith.addf %21, %22 : vector<1x16x16xf32>
    %cst_9 = arith.constant 0.000000e+00 : f32
    %24 = vector.broadcast %cst_9 : f32 to vector<1x16x16xf32>
    %25 = arith.maximumf %23, %24 : vector<1x16x16xf32>
    %c0_i32_10 = arith.constant 0 : i32
    %26 = arith.cmpi eq, %1, %c0_i32_10 : i32
    %cst_11 = arith.constant 0.000000e+00 : f32
    %27 = vector.broadcast %cst_11 : f32 to vector<1x16x16xf32>
    %28 = arith.select %26, %27, %25 : vector<1x16x16xf32>
    %c8_i32_12 = arith.constant 8 : i32
    %29 = arith.addi %1, %c8_i32_12 : i32
    %c15_i32 = arith.constant 15 : i32
    %30 = arith.minsi %29, %c15_i32 : i32
    %c0_13 = arith.constant 0 : index
    %31 = arith.index_cast %30 : i32 to index
    %c0_14 = arith.constant 0 : index
    %c0_15 = arith.constant 0 : index
    %32 = vector.load %arg2[%c0_13, %31, %c0_14, %c0_15] : memref<1x16x16x16xf32, #tpu.memory_space<vmem>>, vector<1x1x16x16xf32>
    %33 = vector.shape_cast %32 : vector<1x1x16x16xf32> to vector<1x16x16xf32>
    %34 = vector.broadcast %3 : vector<1x1x16xf32> to vector<1x16x16xf32>
    %35 = arith.mulf %33, %34 : vector<1x16x16xf32>
    %36 = vector.broadcast %5 : vector<1x1x16xf32> to vector<1x16x16xf32>
    %37 = arith.addf %35, %36 : vector<1x16x16xf32>
    %cst_16 = arith.constant 0.000000e+00 : f32
    %38 = vector.broadcast %cst_16 : f32 to vector<1x16x16xf32>
    %39 = arith.maximumf %37, %38 : vector<1x16x16xf32>
    %c8_i32_17 = arith.constant 8 : i32
    %40 = arith.addi %1, %c8_i32_17 : i32
    %c16_i32 = arith.constant 16 : i32
    %41 = arith.cmpi eq, %40, %c16_i32 : i32
    %cst_18 = arith.constant 0.000000e+00 : f32
    %42 = vector.broadcast %cst_18 : f32 to vector<1x16x16xf32>
    %43 = arith.select %41, %42, %39 : vector<1x16x16xf32>
    %44 = tpu.concatenate %28, %14, %43 in 0 : vector<1x16x16xf32>, vector<8x16x16xf32>, vector<1x16x16xf32> -> vector<10x16x16xf32>
    %cst_19 = arith.constant 0.000000e+00 : f32
    %45 = vector.broadcast %cst_19 : f32 to vector<8x1x16xf32>
    %46 = vector.extract_strided_slice %44 {offsets = [0, 0, 0], sizes = [8, 16, 16], strides = [1, 1, 1]} : vector<10x16x16xf32> to vector<8x16x16xf32>
    %47 = vector.extract_strided_slice %46 {offsets = [0, 0, 0], sizes = [8, 15, 16], strides = [1, 1, 1]} : vector<8x16x16xf32> to vector<8x15x16xf32>
    %48 = tpu.concatenate %45, %47 in 1 : vector<8x1x16xf32>, vector<8x15x16xf32> -> vector<8x16x16xf32>
    %49 = vector.extract_strided_slice %46 {offsets = [0, 1, 0], sizes = [8, 15, 16], strides = [1, 1, 1]} : vector<8x16x16xf32> to vector<8x15x16xf32>
    %50 = tpu.concatenate %49, %45 in 1 : vector<8x15x16xf32>, vector<8x1x16xf32> -> vector<8x16x16xf32>
    %51 = vector.extract_strided_slice %44 {offsets = [1, 0, 0], sizes = [8, 16, 16], strides = [1, 1, 1]} : vector<10x16x16xf32> to vector<8x16x16xf32>
    %52 = vector.extract_strided_slice %51 {offsets = [0, 0, 0], sizes = [8, 15, 16], strides = [1, 1, 1]} : vector<8x16x16xf32> to vector<8x15x16xf32>
    %53 = tpu.concatenate %45, %52 in 1 : vector<8x1x16xf32>, vector<8x15x16xf32> -> vector<8x16x16xf32>
    %54 = vector.extract_strided_slice %51 {offsets = [0, 1, 0], sizes = [8, 15, 16], strides = [1, 1, 1]} : vector<8x16x16xf32> to vector<8x15x16xf32>
    %55 = tpu.concatenate %54, %45 in 1 : vector<8x15x16xf32>, vector<8x1x16xf32> -> vector<8x16x16xf32>
    %56 = vector.extract_strided_slice %44 {offsets = [2, 0, 0], sizes = [8, 16, 16], strides = [1, 1, 1]} : vector<10x16x16xf32> to vector<8x16x16xf32>
    %57 = vector.extract_strided_slice %56 {offsets = [0, 0, 0], sizes = [8, 15, 16], strides = [1, 1, 1]} : vector<8x16x16xf32> to vector<8x15x16xf32>
    %58 = tpu.concatenate %45, %57 in 1 : vector<8x1x16xf32>, vector<8x15x16xf32> -> vector<8x16x16xf32>
    %59 = vector.extract_strided_slice %56 {offsets = [0, 1, 0], sizes = [8, 15, 16], strides = [1, 1, 1]} : vector<8x16x16xf32> to vector<8x15x16xf32>
    %60 = tpu.concatenate %59, %45 in 1 : vector<8x15x16xf32>, vector<8x1x16xf32> -> vector<8x16x16xf32>
    %61 = tpu.concatenate %48, %46, %50, %53, %51, %55, %58, %56, %60 in 2 : vector<8x16x16xf32>, vector<8x16x16xf32>, vector<8x16x16xf32>, vector<8x16x16xf32>, vector<8x16x16xf32>, vector<8x16x16xf32>, vector<8x16x16xf32>, vector<8x16x16xf32>, vector<8x16x16xf32> -> vector<8x16x144xf32>
    %62 = vector.shape_cast %61 : vector<8x16x144xf32> to vector<128x144xf32>
    %c0_20 = arith.constant 0 : index
    %c0_21 = arith.constant 0 : index
    %63 = vector.load %arg3[%c0_20, %c0_21] : memref<144x128xf32, #tpu.memory_space<vmem>>, vector<144x128xf32>
    %cst_22 = arith.constant dense<0.000000e+00> : vector<128x128xf32>
    %64 = tpu.matmul %62, %63, %cst_22 {dimension_numbers = #tpu.dot_dimension_numbers<[1], [0], [0], [1], [0, 0, 1, 1], [], []>} : vector<128x144xf32>, vector<144x128xf32>, vector<128x128xf32> -> vector<128x128xf32>
    %c0_23 = arith.constant 0 : index
    %c0_24 = arith.constant 0 : index
    %65 = vector.load %arg6[%c0_23, %c0_24] : memref<1x128xf32, #tpu.memory_space<vmem>>, vector<1x128xf32>
    %66 = vector.broadcast %65 : vector<1x128xf32> to vector<128x128xf32>
    %67 = arith.mulf %64, %66 : vector<128x128xf32>
    %c0_25 = arith.constant 0 : index
    %c0_26 = arith.constant 0 : index
    %68 = vector.load %arg7[%c0_25, %c0_26] : memref<1x128xf32, #tpu.memory_space<vmem>>, vector<1x128xf32>
    %69 = vector.broadcast %68 : vector<1x128xf32> to vector<128x128xf32>
    %70 = arith.addf %67, %69 : vector<128x128xf32>
    %cst_27 = arith.constant 0.000000e+00 : f32
    %71 = vector.broadcast %cst_27 : f32 to vector<128x128xf32>
    %72 = arith.maximumf %70, %71 : vector<128x128xf32>
    %c0_28 = arith.constant 0 : index
    %c0_29 = arith.constant 0 : index
    %73 = vector.load %arg8[%c0_28, %c0_29] : memref<128x8xf32, #tpu.memory_space<vmem>>, vector<128x8xf32>
    %cst_30 = arith.constant dense<0.000000e+00> : vector<128x8xf32>
    %74 = tpu.matmul %72, %73, %cst_30 {dimension_numbers = #tpu.dot_dimension_numbers<[1], [0], [0], [1], [0, 0, 1, 1], [], []>} : vector<128x128xf32>, vector<128x8xf32>, vector<128x8xf32> -> vector<128x8xf32>
    %c0_31 = arith.constant 0 : index
    %c0_32 = arith.constant 0 : index
    %75 = vector.load %arg9[%c0_31, %c0_32] : memref<1x8xf32, #tpu.memory_space<vmem>>, vector<1x8xf32>
    %76 = vector.broadcast %75 : vector<1x8xf32> to vector<128x8xf32>
    %77 = arith.addf %74, %76 : vector<128x8xf32>
    %78 = vector.shape_cast %77 : vector<128x8xf32> to vector<1x8x16x8xf32>
    %c0_33 = arith.constant 0 : index
    %c0_34 = arith.constant 0 : index
    %c0_35 = arith.constant 0 : index
    %c0_36 = arith.constant 0 : index
    %79 = vector.load %arg10[%c0_33, %c0_34, %c0_35, %c0_36] : memref<1x8x16x8xf32, #tpu.memory_space<vmem>>, vector<1x8x16x8xf32>
    tpu.vector_store %arg10[%c0_33, %c0_34, %c0_35, %c0_36], %78 {strides = array<i32>} : memref<1x8x16x8xf32, #tpu.memory_space<vmem>>, vector<1x8x16x8xf32>,
    return
  }
  func.func @transform_0(%arg0: i32, %arg1: i32) -> (i32, i32, i32, i32) {
    %c0_i32 = arith.constant 0 : i32
    %c0_i32_0 = arith.constant 0 : i32
    %c0_i32_1 = arith.constant 0 : i32
    %c0_i32_2 = arith.constant 0 : i32
    return %arg0, %c0_i32, %c0_i32_0, %c0_i32_1 : i32, i32, i32, i32
  }
  func.func @transform_1(%arg0: i32, %arg1: i32) -> (i32, i32) {
    %c0_i32 = arith.constant 0 : i32
    %c0_i32_0 = arith.constant 0 : i32
    %c0_i32_1 = arith.constant 0 : i32
    return %c0_i32, %c0_i32_0 : i32, i32
  }
  func.func @transform_2(%arg0: i32, %arg1: i32) -> (i32, i32) {
    %c0_i32 = arith.constant 0 : i32
    %c0_i32_0 = arith.constant 0 : i32
    %c0_i32_1 = arith.constant 0 : i32
    return %c0_i32, %c0_i32_0 : i32, i32
  }
  func.func @transform_3(%arg0: i32, %arg1: i32) -> (i32, i32) {
    %c0_i32 = arith.constant 0 : i32
    %c0_i32_0 = arith.constant 0 : i32
    %c0_i32_1 = arith.constant 0 : i32
    return %c0_i32, %c0_i32_0 : i32, i32
  }
  func.func @transform_4(%arg0: i32, %arg1: i32) -> (i32, i32) {
    %c0_i32 = arith.constant 0 : i32
    %c0_i32_0 = arith.constant 0 : i32
    %c0_i32_1 = arith.constant 0 : i32
    return %c0_i32, %c0_i32_0 : i32, i32
  }
  func.func @transform_5(%arg0: i32, %arg1: i32) -> (i32, i32) {
    %c0_i32 = arith.constant 0 : i32
    %c0_i32_0 = arith.constant 0 : i32
    %c0_i32_1 = arith.constant 0 : i32
    return %c0_i32, %c0_i32_0 : i32, i32
  }
  func.func @transform_6(%arg0: i32, %arg1: i32) -> (i32, i32) {
    %c0_i32 = arith.constant 0 : i32
    %c0_i32_0 = arith.constant 0 : i32
    %c0_i32_1 = arith.constant 0 : i32
    return %c0_i32, %c0_i32_0 : i32, i32
  }
  func.func @transform_7(%arg0: i32, %arg1: i32) -> (i32, i32) {
    %c0_i32 = arith.constant 0 : i32
    %c0_i32_0 = arith.constant 0 : i32
    %c0_i32_1 = arith.constant 0 : i32
    return %c0_i32, %c0_i32_0 : i32, i32
  }
  func.func @transform_8(%arg0: i32, %arg1: i32) -> (i32, i32, i32, i32) {
    %c0_i32 = arith.constant 0 : i32
    %c0_i32_0 = arith.constant 0 : i32
    %c0_i32_1 = arith.constant 0 : i32
    return %arg0, %arg1, %c0_i32, %c0_i32_0 : i32, i32, i32, i32
  }
}

</mosaic_0001>

<llo_original>
// kernel: segmenthead_forward.1
$region0: #{segmenthead_forward.1}
  #allocation0 [shape = 'u32[]', space=smem, size = 0x4, offset = 0x4, fixed_abs, tag = 'smem constant byte address 0x4 - core index']
  #allocation1 [shape = 'u32[72,128]{1,0:T(1,128)}', space=vmem, size = 0x9000, scoped, tag = 'internal scratch']
  %s0 = inlined_call_operand.vmem [shape: f32[2,16,16,16], index: 0, kind: input, shape index: {}]
  %s1 = inlined_call_operand.vmem [shape: f32[144,128], index: 1, kind: input, shape index: {}]
  %s2 = inlined_call_operand.vmem [shape: f32[1,16], index: 2, kind: input, shape index: {}]
  %s3 = inlined_call_operand.vmem [shape: f32[1,16], index: 3, kind: input, shape index: {}]
  %s4 = inlined_call_operand.vmem [shape: f32[1,128], index: 4, kind: input, shape index: {}]
  %s5 = inlined_call_operand.vmem [shape: f32[1,128], index: 5, kind: input, shape index: {}]
  %s6 = inlined_call_operand.vmem [shape: f32[128,8], index: 6, kind: input, shape index: {}]
  %s7 = inlined_call_operand.vmem [shape: f32[1,8], index: 7, kind: input, shape index: {}]
  %s8 = inlined_call_operand.vmem [shape: f32[2,16,16,8], index: 8, kind: output, shape index: {}]
  %s9 = sld [smem:[#allocation0]]
  $region65: #{segmenthead_forward.1} parent=0
    _
  %s11 = ssub.s32 1, %s9
  %s12 = scalar_select 0, %s11, %s9
  loop: start=0, step=1, limit=6
  $region2: #{segmenthead_forward.1} parent=0 // loop_pre_header
    _
  $region3: #{segmenthead_forward.1} parent=0 // loop_header
    %s14 = sphi 0, %s18
    %p15 = scmp.ge.s32.totalorder %s14, 6
    %s21 = sphi 0, %s33
    %s22 = sphi 0, %s29
    %s23 = sphi 0, %s21
    %s24 = sphi 0, %s22
    %s25 = sphi 0, %s23
    %s26 = sphi 0, %s24
    %s36 = sphi 0, %s38
    %s39 = sphi 0, %s36
    %s40 = sphi 0, %s39
    %s56 = sphi 0, %s40
    %s60 = sphi 0, %s60
    %s62 = sphi 0, %s60
    %s63 = sphi 0, %s62
    %s77 = sphi 0, %s63
    %s81 = sphi 0, %s81
    %s83 = sphi 0, %s81
    %s84 = sphi 0, %s83
    %s98 = sphi 0, %s84
    %s102 = sphi 0, %s102
    %s104 = sphi 0, %s102
    %s105 = sphi 0, %s104
    %s119 = sphi 0, %s105
    %s123 = sphi 0, %s123
    %s125 = sphi 0, %s123
    %s126 = sphi 0, %s125
    %s140 = sphi 0, %s126
    %s144 = sphi 0, %s144
    %s146 = sphi 0, %s144
    %s147 = sphi 0, %s146
    %s161 = sphi 0, %s147
    %s165 = sphi 0, %s165
    %s167 = sphi 0, %s165
    %s168 = sphi 0, %s167
    %s182 = sphi 0, %s168
    %s186 = sphi 0, %s186
    %s188 = sphi 0, %s186
    %s189 = sphi 0, %s188
    %s203 = sphi 0, %s189
    %s211 = sphi 0, %s213
    %s214 = sphi 0, %s211
    %s215 = sphi 0, %s214
    %s231 = sphi 0, %s215
  $region4: #{segmenthead_forward.1} parent=0 // loop_header_branch
    %17 = sbr.rel (%p15) target = $region8
  $region5: #{segmenthead_forward.1} parent=0 // loop_body
    %s19 = ssub.s32 %s14, 1
    %s20 = ssub.s32 %s14, 2
    %s27 = sadd.s32 1, %s22
    %p28 = scmp.ge.s32.totalorder %s27, 2
    %s29 = scalar_select %p28, 0, %s27
    %s30 = sadd.s32 1, %s21
    %s31 = scalar_select %p28, %s30, %s21
    %p32 = scmp.ge.s32.totalorder %s31, 2
    %s33 = scalar_select %p32, 0, %s31
    %s34 = ssub.s32 %s21, %s33
    %p35 = scmp.eq.s32.totalorder %s34, 0
    %s37 = sadd.s32 %s36, 1
    %s38 = scalar_select %p35, %s36, %s37
    %p41 = pneg %p35
    %p42 = scmp.eq.s32.totalorder %s14, 3
    %p43 = por %p41, %p42
    %p44 = scmp.ne.s32.totalorder %s36, %s39
    %p45 = scmp.eq.s32.totalorder %s14, 0
    %p46 = por %p44, %p45
    %p47 = scmp.ne.s32.totalorder %s36, %s39
    %p48 = scmp.eq.s32.totalorder %s19, 3
    %p49 = por %p47, %p48
    %p50 = scmp.ne.s32.totalorder %s39, %s40
    %p51 = scmp.eq.s32.totalorder %s19, 0
    %p52 = por %p50, %p51
    %p53 = scmp.ne.s32.totalorder %s39, %s40
    %p54 = scmp.eq.s32.totalorder %s20, 3
    %p55 = por %p53, %p54
    %p57 = scmp.ne.s32.totalorder %s40, %s56
    %p58 = scmp.eq.s32.totalorder %s20, 0
    %p59 = por %p57, %p58
    %s61 = sadd.s32 %s60, 1
    %p64 = scmp.eq.s32.totalorder %s14, 3
    %p65 = scmp.ne.s32.totalorder %s60, %s62
    %p66 = scmp.eq.s32.totalorder %s14, 0
    %p67 = por %p65, %p66
    %p68 = scmp.ne.s32.totalorder %s60, %s62
    %p69 = scmp.eq.s32.totalorder %s19, 3
    %p70 = por %p68, %p69
    %p71 = scmp.ne.s32.totalorder %s62, %s63
    %p72 = scmp.eq.s32.totalorder %s19, 0
    %p73 = por %p71, %p72
    %p74 = scmp.ne.s32.totalorder %s62, %s63
    %p75 = scmp.eq.s32.totalorder %s20, 3
    %p76 = por %p74, %p75
    %p78 = scmp.ne.s32.totalorder %s63, %s77
    %p79 = scmp.eq.s32.totalorder %s20, 0
    %p80 = por %p78, %p79
    %s82 = sadd.s32 %s81, 1
    %p85 = scmp.eq.s32.totalorder %s14, 3
    %p86 = scmp.ne.s32.totalorder %s81, %s83
    %p87 = scmp.eq.s32.totalorder %s14, 0
    %p88 = por %p86, %p87
    %p89 = scmp.ne.s32.totalorder %s81, %s83
    %p90 = scmp.eq.s32.totalorder %s19, 3
    %p91 = por %p89, %p90
    %p92 = scmp.ne.s32.totalorder %s83, %s84
    %p93 = scmp.eq.s32.totalorder %s19, 0
    %p94 = por %p92, %p93
    %p95 = scmp.ne.s32.totalorder %s83, %s84
    %p96 = scmp.eq.s32.totalorder %s20, 3
    %p97 = por %p95, %p96
    %p99 = scmp.ne.s32.totalorder %s84, %s98
    %p100 = scmp.eq.s32.totalorder %s20, 0
    %p101 = por %p99, %p100
    %s103 = sadd.s32 %s102, 1
    %p106 = scmp.eq.s32.totalorder %s14, 3
    %p107 = scmp.ne.s32.totalorder %s102, %s104
    %p108 = scmp.eq.s32.totalorder %s14, 0
    %p109 = por %p107, %p108
    %p110 = scmp.ne.s32.totalorder %s102, %s104
    %p111 = scmp.eq.s32.totalorder %s19, 3
    %p112 = por %p110, %p111
    %p113 = scmp.ne.s32.totalorder %s104, %s105
    %p114 = scmp.eq.s32.totalorder %s19, 0
    %p115 = por %p113, %p114
    %p116 = scmp.ne.s32.totalorder %s104, %s105
    %p117 = scmp.eq.s32.totalorder %s20, 3
    %p118 = por %p116, %p117
    %p120 = scmp.ne.s32.totalorder %s105, %s119
    %p121 = scmp.eq.s32.totalorder %s20, 0
    %p122 = por %p120, %p121
    %s124 = sadd.s32 %s123, 1
    %p127 = scmp.eq.s32.totalorder %s14, 3
    %p128 = scmp.ne.s32.totalorder %s123, %s125
    %p129 = scmp.eq.s32.totalorder %s14, 0
    %p130 = por %p128, %p129
    %p131 = scmp.ne.s32.totalorder %s123, %s125
    %p132 = scmp.eq.s32.totalorder %s19, 3
    %p133 = por %p131, %p132
    %p134 = scmp.ne.s32.totalorder %s125, %s126
    %p135 = scmp.eq.s32.totalorder %s19, 0
    %p136 = por %p134, %p135
    %p137 = scmp.ne.s32.totalorder %s125, %s126
    %p138 = scmp.eq.s32.totalorder %s20, 3
    %p139 = por %p137, %p138
    %p141 = scmp.ne.s32.totalorder %s126, %s140
    %p142 = scmp.eq.s32.totalorder %s20, 0
    %p143 = por %p141, %p142
    %s145 = sadd.s32 %s144, 1
    %p148 = scmp.eq.s32.totalorder %s14, 3
    %p149 = scmp.ne.s32.totalorder %s144, %s146
    %p150 = scmp.eq.s32.totalorder %s14, 0
    %p151 = por %p149, %p150
    %p152 = scmp.ne.s32.totalorder %s144, %s146
    %p153 = scmp.eq.s32.totalorder %s19, 3
    %p154 = por %p152, %p153
    %p155 = scmp.ne.s32.totalorder %s146, %s147
    %p156 = scmp.eq.s32.totalorder %s19, 0
    %p157 = por %p155, %p156
    %p158 = scmp.ne.s32.totalorder %s146, %s147
    %p159 = scmp.eq.s32.totalorder %s20, 3
    %p160 = por %p158, %p159
    %p162 = scmp.ne.s32.totalorder %s147, %s161
    %p163 = scmp.eq.s32.totalorder %s20, 0
    %p164 = por %p162, %p163
    %s166 = sadd.s32 %s165, 1
    %p169 = scmp.eq.s32.totalorder %s14, 3
    %p170 = scmp.ne.s32.totalorder %s165, %s167
    %p171 = scmp.eq.s32.totalorder %s14, 0
    %p172 = por %p170, %p171
    %p173 = scmp.ne.s32.totalorder %s165, %s167
    %p174 = scmp.eq.s32.totalorder %s19, 3
    %p175 = por %p173, %p174
    %p176 = scmp.ne.s32.totalorder %s167, %s168
    %p177 = scmp.eq.s32.totalorder %s19, 0
    %p178 = por %p176, %p177
    %p179 = scmp.ne.s32.totalorder %s167, %s168
    %p180 = scmp.eq.s32.totalorder %s20, 3
    %p181 = por %p179, %p180
    %p183 = scmp.ne.s32.totalorder %s168, %s182
    %p184 = scmp.eq.s32.totalorder %s20, 0
    %p185 = por %p183, %p184
    %s187 = sadd.s32 %s186, 1
    %p190 = scmp.eq.s32.totalorder %s14, 3
    %p191 = scmp.ne.s32.totalorder %s186, %s188
    %p192 = scmp.eq.s32.totalorder %s14, 0
    %p193 = por %p191, %p192
    %p194 = scmp.ne.s32.totalorder %s186, %s188
    %p195 = scmp.eq.s32.totalorder %s19, 3
    %p196 = por %p194, %p195
    %p197 = scmp.ne.s32.totalorder %s188, %s189
    %p198 = scmp.eq.s32.totalorder %s19, 0
    %p199 = por %p197, %p198
    %p200 = scmp.ne.s32.totalorder %s188, %s189
    %p201 = scmp.eq.s32.totalorder %s20, 3
    %p202 = por %p200, %p201
    %p204 = scmp.ne.s32.totalorder %s189, %s203
    %p205 = scmp.eq.s32.totalorder %s20, 0
    %p206 = por %p204, %p205
    %s207 = ssub.s32 %s21, %s33
    %s208 = ssub.s32 %s22, %s29
    %s209 = sor.u32 %s207, %s208
    %p210 = scmp.eq.s32.totalorder %s209, 0
    %s212 = sadd.s32 %s211, 1
    %s213 = scalar_select %p210, %s211, %s212
    %p216 = pneg %p210
    %p217 = scmp.eq.s32.totalorder %s14, 3
    %p218 = por %p216, %p217
    %p219 = scmp.ne.s32.totalorder %s211, %s214
    %p220 = scmp.eq.s32.totalorder %s14, 0
    %p221 = por %p219, %p220
    %p222 = scmp.ne.s32.totalorder %s211, %s214
    %p223 = scmp.eq.s32.totalorder %s19, 3
    %p224 = por %p222, %p223
    %p225 = scmp.ne.s32.totalorder %s214, %s215
    %p226 = scmp.eq.s32.totalorder %s19, 0
    %p227 = por %p225, %p226
    %p228 = scmp.ne.s32.totalorder %s214, %s215
    %p229 = scmp.eq.s32.totalorder %s20, 3
    %p230 = por %p228, %p229
    %p232 = scmp.ne.s32.totalorder %s215, %s231
    %p233 = scmp.eq.s32.totalorder %s20, 0
    %p234 = por %p232, %p233
    %p235 = scmp.le.s32.totalorder 1, %s14
    %p236 = scmp.lt.s32.totalorder %s14, 5
    %p237 = pnand %p235, %p236
    %p238 = pneg %p237
    // Predicated region
    $region9: #{segmenthead_forward.1} parent=5 // pred_check
      _
    $region10: #{segmenthead_forward.1} parent=5 // pred_check_branch
      %240 = sbr.rel (%p237) target = $region12
    $region11: #{segmenthead_forward.1} parent=5 // pred_region
      %s241 = ssub.s32 %s14, 1
      // Predicated region
      $region13: #{segmenthead_forward.1} parent=11 // pred_check
        %p242 = pneg %p73
      $region14: #{segmenthead_forward.1} parent=11 // pred_check_branch
        %244 = sbr.rel (%p242) target = $region16
      $region15: #{segmenthead_forward.1} parent=11 // pred_region
        _
      $region16: #{segmenthead_forward.1} parent=11 // pred_fallthru
        _
      // Predicated region
      $region17: #{segmenthead_forward.1} parent=11 // pred_check
        %p245 = pneg %p94
      $region18: #{segmenthead_forward.1} parent=11 // pred_check_branch
        %247 = sbr.rel (%p245) target = $region20
      $region19: #{segmenthead_forward.1} parent=11 // pred_region
        _
      $region20: #{segmenthead_forward.1} parent=11 // pred_fallthru
        _
      // Predicated region
      $region21: #{segmenthead_forward.1} parent=11 // pred_check
        %p248 = pneg %p115
      $region22: #{segmenthead_forward.1} parent=11 // pred_check_branch
        %250 = sbr.rel (%p248) target = $region24
      $region23: #{segmenthead_forward.1} parent=11 // pred_region
        _
      $region24: #{segmenthead_forward.1} parent=11 // pred_fallthru
        _
      // Predicated region
      $region25: #{segmenthead_forward.1} parent=11 // pred_check
        %p251 = pneg %p136
      $region26: #{segmenthead_forward.1} parent=11 // pred_check_branch
        %253 = sbr.rel (%p251) target = $region28
      $region27: #{segmenthead_forward.1} parent=11 // pred_region
        _
      $region28: #{segmenthead_forward.1} parent=11 // pred_fallthru
        _
      // Predicated region
      $region29: #{segmenthead_forward.1} parent=11 // pred_check
        %p254 = pneg %p157
      $region30: #{segmenthead_forward.1} parent=11 // pred_check_branch
        %256 = sbr.rel (%p254) target = $region32
      $region31: #{segmenthead_forward.1} parent=11 // pred_region
        _
      $region32: #{segmenthead_forward.1} parent=11 // pred_fallthru
        _
      // Predicated region
      $region33: #{segmenthead_forward.1} parent=11 // pred_check
        %p257 = pneg %p178
      $region34: #{segmenthead_forward.1} parent=11 // pred_check_branch
        %259 = sbr.rel (%p257) target = $region36
      $region35: #{segmenthead_forward.1} parent=11 // pred_region
        _
      $region36: #{segmenthead_forward.1} parent=11 // pred_fallthru
        _
      // Predicated region
      $region37: #{segmenthead_forward.1} parent=11 // pred_check
        %p260 = pneg %p199
      $region38: #{segmenthead_forward.1} parent=11 // pred_check_branch
        %262 = sbr.rel (%p260) target = $region40
      $region39: #{segmenthead_forward.1} parent=11 // pred_region
        _
      $region40: #{segmenthead_forward.1} parent=11 // pred_fallthru
        _
    $region12: #{segmenthead_forward.1} parent=5 // pred_fallthru
      _
    %p263 = scmp.lt.s32.totalorder %s14, 4
    // Predicated region
    $region41: #{segmenthead_forward.1} parent=5 // pred_check
      %p264 = pneg %p263
    $region42: #{segmenthead_forward.1} parent=5 // pred_check_branch
      %266 = sbr.rel (%p264) target = $region44
    $region43: #{segmenthead_forward.1} parent=5 // pred_region
      // Predicated region
      $region45: #{segmenthead_forward.1} parent=43 // pred_check
        %p267 = pneg %p46
      $region46: #{segmenthead_forward.1} parent=43 // pred_check_branch
        %269 = sbr.rel (%p267) target = $region48
      $region47: #{segmenthead_forward.1} parent=43 // pred_region
        %p270 = scmp.lt.s32.totalorder %s21, 1
        %s271 = scalar_select %p270, %s21, 1
        %s272 = smul.addr %s271, 32
        %s273 = smul.addr %s272, 8
        %s274 = scalar_lea.vmem %s0, %s273
      $region48: #{segmenthead_forward.1} parent=43 // pred_fallthru
        _
    $region44: #{segmenthead_forward.1} parent=5 // pred_fallthru
      _
    %p275 = scmp.le.s32.totalorder 1, %s14
    %p276 = scmp.lt.s32.totalorder %s14, 5
    %p277 = pnand %p275, %p276
    %p278 = pneg %p277
    // Predicated region
    $region49: #{segmenthead_forward.1} parent=5 // pred_check
      _
    $region50: #{segmenthead_forward.1} parent=5 // pred_check_branch
      %280 = sbr.rel (%p277) target = $region52
    $region51: #{segmenthead_forward.1} parent=5 // pred_region
      %s281 = ssub.s32 %s14, 1
      %p282 = scmp.lt.s32.totalorder %s23, 1
      %s283 = scalar_select %p282, %s23, 1
      %s284 = smul.addr %s283, 32
      %s285 = smul.addr %s284, 8
      %s286 = scalar_lea.vmem %s0, %s285
      %p287 = pneg %p52
      %p288 = pneg %p49
      %p289 = pneg %p73
      %p290 = pneg %p70
      %p291 = pneg %p94
      %p292 = pneg %p91
      %p293 = pneg %p115
      %p294 = pneg %p112
      %p295 = pneg %p136
      %p296 = pneg %p133
      %p297 = pneg %p157
      %p298 = pneg %p154
      %p299 = pneg %p178
      %p300 = pneg %p175
      %p301 = pneg %p199
      %p302 = pneg %p196
      %p303 = pneg %p227
      %p304 = pneg %p224
      %s305 = smul.u32 8, %s24
      %p306 = scmp.lt.s32.totalorder %s23, 1
      %s307 = scalar_select %p306, %s23, 1
      %p308 = scmp.lt.s32.totalorder %s305, 15
      %s309 = scalar_select %p308, %s305, 15
      %s310 = smul.addr %s309, 2
      %s311 = smul.addr %s307, 32
      %s312 = sadd.s32 %s310, %s311
      %s313 = smul.addr %s312, 8
      %s314 = scalar_lea.vmem %s8, %s313
      %p315 = scmp.lt.s32.totalorder %s23, 1
      %s316 = scalar_select %p315, %s23, 1
      %s317 = smul.addr %s316, 32
      %s318 = smul.addr %s317, 8
      %s319 = scalar_lea.vmem %s0, %s318
      %s320 = smul.u32 8, %s24
      %p321 = scmp.lt.s32.totalorder %s23, 1
      %s322 = scalar_select %p321, %s23, 1
      %p323 = scmp.lt.s32.totalorder %s320, 15
      %s324 = scalar_select %p323, %s320, 15
      %s325 = smul.addr %s324, 2
      %s326 = smul.addr %s322, 32
      %s327 = sadd.s32 %s325, %s326
      %s328 = smul.addr %s327, 8
      %s329 = scalar_lea.vmem %s8, %s328
      %s330 = smul.u32 8, %s24
      %s331 = smul.u32 %s24, 8
      %v332 = vld [vmem:[%s2] sm:$0x1]
      %v333 = vld [vmem:[%s3] sm:$0x1]
      %s334 = smul.u32 %s331, 16
      %s335 = scalar_lea.vmem %s319, %s334
      %v336 = vld [vmem:[%s335] sm:$0xff]
      %v337 = vld [vmem:[%s335 + $0x8] sm:$0xff]
      %v338 = vld [vmem:[%s335 + $0x10] sm:$0xff]
      %v339 = vld [vmem:[%s335 + $0x18] sm:$0xff]
      %v340 = vld [vmem:[%s335 + $0x20] sm:$0xff]
      %v341 = vld [vmem:[%s335 + $0x28] sm:$0xff]
      %v342 = vld [vmem:[%s335 + $0x30] sm:$0xff]
      %v343 = vld [vmem:[%s335 + $0x38] sm:$0xff]
      %v344 = vld [vmem:[%s335 + $0x40] sm:$0xff]
      %v345 = vld [vmem:[%s335 + $0x48] sm:$0xff]
      %v346 = vld [vmem:[%s335 + $0x50] sm:$0xff]
      %v347 = vld [vmem:[%s335 + $0x58] sm:$0xff]
      %v348 = vld [vmem:[%s335 + $0x60] sm:$0xff]
      %v349 = vld [vmem:[%s335 + $0x68] sm:$0xff]
      %v350 = vld [vmem:[%s335 + $0x70] sm:$0xff]
      %v351 = vld [vmem:[%s335 + $0x78] sm:$0xff]
      %v353 = vperm.slane %v332, 0
      %v355 = vmul.f32 %v336, %v353
      %v356 = vmul.f32 %v337, %v353
      %v357 = vmul.f32 %v338, %v353
      %v358 = vmul.f32 %v339, %v353
      %v359 = vmul.f32 %v340, %v353
      %v360 = vmul.f32 %v341, %v353
      %v361 = vmul.f32 %v342, %v353
      %v362 = vmul.f32 %v343, %v353
      %v363 = vmul.f32 %v344, %v353
      %v364 = vmul.f32 %v345, %v353
      %v365 = vmul.f32 %v346, %v353
      %v366 = vmul.f32 %v347, %v353
      %v367 = vmul.f32 %v348, %v353
      %v368 = vmul.f32 %v349, %v353
      %v369 = vmul.f32 %v350, %v353
      %v370 = vmul.f32 %v351, %v353
      %v372 = vperm.slane %v333, 0
      %v374 = vadd.f32 %v355, %v372
      %v375 = vadd.f32 %v356, %v372
      %v376 = vadd.f32 %v357, %v372
      %v377 = vadd.f32 %v358, %v372
      %v378 = vadd.f32 %v359, %v372
      %v379 = vadd.f32 %v360, %v372
      %v380 = vadd.f32 %v361, %v372
      %v381 = vadd.f32 %v362, %v372
      %v382 = vadd.f32 %v363, %v372
      %v383 = vadd.f32 %v364, %v372
      %v384 = vadd.f32 %v365, %v372
      %v385 = vadd.f32 %v366, %v372
      %v386 = vadd.f32 %v367, %v372
      %v387 = vadd.f32 %v368, %v372
      %v388 = vadd.f32 %v369, %v372
      %v389 = vadd.f32 %v370, %v372
      %v390 = vmax.f32 %v374, 0.0
      %v391 = vmax.f32 %v375, 0.0
      %v392 = vmax.f32 %v376, 0.0
      %v393 = vmax.f32 %v377, 0.0
      %v394 = vmax.f32 %v378, 0.0
      %v395 = vmax.f32 %v379, 0.0
      %v396 = vmax.f32 %v380, 0.0
      %v397 = vmax.f32 %v381, 0.0
      %v398 = vmax.f32 %v382, 0.0
      %v399 = vmax.f32 %v383, 0.0
      %v400 = vmax.f32 %v384, 0.0
      %v401 = vmax.f32 %v385, 0.0
      %v402 = vmax.f32 %v386, 0.0
      %v403 = vmax.f32 %v387, 0.0
      %v404 = vmax.f32 %v388, 0.0
      %v405 = vmax.f32 %v389, 0.0
      %s406 = ssub.s32 %s331, 1
      %p407 = scmp.gt.s32.totalorder %s406, 0
      %s408 = scalar_select %p407, %s406, 0
      %s409 = smul.u32 %s408, 16
      %s410 = scalar_lea.vmem %s319, %s409
      %v411 = vld [vmem:[%s410] sm:$0xff]
      %v412 = vld [vmem:[%s410 + $0x8] sm:$0xff]
      %v413 = vmul.f32 %v411, %v353
      %v414 = vmul.f32 %v412, %v353
      %v415 = vadd.f32 %v413, %v372
      %v416 = vadd.f32 %v414, %v372
      %v417 = vmax.f32 %v415, 0.0
      %v418 = vmax.f32 %v416, 0.0
      %p419 = scmp.eq.s32.totalorder %s331, 0
      %s420 = scalar_select %p419, 1, 0
      %v421 = vstv %s420
      %vm422 = vcmp.eq.s32.totalorder %v421, 1
      %v423 = vsel %vm422, 0.0, %v417
      %v424 = vsel %vm422, 0.0, %v418
      %s425 = sadd.s32 %s331, 8
      %p426 = scmp.lt.s32.totalorder %s425, 15
      %s427 = scalar_select %p426, %s425, 15
      %s428 = smul.u32 %s427, 16
      %s429 = scalar_lea.vmem %s319, %s428
      %v430 = vld [vmem:[%s429] sm:$0xff]
      %v431 = vld [vmem:[%s429 + $0x8] sm:$0xff]
      %v432 = vmul.f32 %v430, %v353
      %v433 = vmul.f32 %v431, %v353
      %v434 = vadd.f32 %v432, %v372
      %v435 = vadd.f32 %v433, %v372
      %v436 = vmax.f32 %v434, 0.0
      %v437 = vmax.f32 %v435, 0.0
      %p438 = scmp.eq.s32.totalorder %s425, 16
      %s439 = scalar_select %p438, 1, 0
      %v440 = vstv %s439
      %vm441 = vcmp.eq.s32.totalorder %v440, 1
      %v442 = vsel %vm441, 0.0, %v436
      %v443 = vsel %vm441, 0.0, %v437
      %vm460 = vcmask 1040384
      %v461 = vrot.slane %v423, 7
      %v462 = vrot.slane %v424, 7
      %v463 = vsel %vm460, %v461, %v462
      %v464 = vrot.slane %v390, 7
      %v465 = vrot.slane %v391, 7
      %v466 = vsel %vm460, %v464, %v465
      %v467 = vrot.slane %v392, 7
      %v468 = vrot.slane %v393, 7
      %v469 = vsel %vm460, %v467, %v468
      %v470 = vrot.slane %v394, 7
      %v471 = vrot.slane %v395, 7
      %v472 = vsel %vm460, %v470, %v471
      %v473 = vrot.slane %v396, 7
      %v474 = vrot.slane %v397, 7
      %v475 = vsel %vm460, %v473, %v474
      %v476 = vrot.slane %v398, 7
      %v477 = vrot.slane %v399, 7
      %v478 = vsel %vm460, %v476, %v477
      %v479 = vrot.slane %v400, 7
      %v480 = vrot.slane %v401, 7
      %v481 = vsel %vm460, %v479, %v480
      %v482 = vrot.slane %v402, 7
      %v483 = vrot.slane %v403, 7
      %v484 = vsel %vm460, %v482, %v483
      %v501 = vsel %vm460, 0.0, %v461
      %v502 = vsel %vm460, 0.0, %v464
      %v503 = vsel %vm460, 0.0, %v467
      %v504 = vsel %vm460, 0.0, %v470
      %v505 = vsel %vm460, 0.0, %v473
      %v506 = vsel %vm460, 0.0, %v476
      %v507 = vsel %vm460, 0.0, %v479
      %v508 = vsel %vm460, 0.0, %v482
      %vm509 = vcmask 1046528
      %v510 = vrot.slane %v423, 1
      %v511 = vrot.slane %v424, 1
      %v512 = vsel %vm509, %v510, %v511
      %v513 = vrot.slane %v390, 1
      %v514 = vrot.slane %v391, 1
      %v515 = vsel %vm509, %v513, %v514
      %v516 = vrot.slane %v392, 1
      %v517 = vrot.slane %v393, 1
      %v518 = vsel %vm509, %v516, %v517
      %v519 = vrot.slane %v394, 1
      %v520 = vrot.slane %v395, 1
      %v521 = vsel %vm509, %v519, %v520
      %v522 = vrot.slane %v396, 1
      %v523 = vrot.slane %v397, 1
      %v524 = vsel %vm509, %v522, %v523
      %v525 = vrot.slane %v398, 1
      %v526 = vrot.slane %v399, 1
      %v527 = vsel %vm509, %v525, %v526
      %v528 = vrot.slane %v400, 1
      %v529 = vrot.slane %v401, 1
      %v530 = vsel %vm509, %v528, %v529
      %v531 = vrot.slane %v402, 1
      %v532 = vrot.slane %v403, 1
      %v533 = vsel %vm509, %v531, %v532
      %v542 = vsel %vm509, %v511, 0.0
      %v543 = vsel %vm509, %v514, 0.0
      %v544 = vsel %vm509, %v517, 0.0
      %v545 = vsel %vm509, %v520, 0.0
      %v546 = vsel %vm509, %v523, 0.0
      %v547 = vsel %vm509, %v526, 0.0
      %v548 = vsel %vm509, %v529, 0.0
      %v549 = vsel %vm509, %v532, 0.0
      %v552 = vrot.slane %v404, 7
      %v553 = vrot.slane %v405, 7
      %v554 = vsel %vm460, %v552, %v553
      %v556 = vsel %vm460, 0.0, %v552
      %v557 = vrot.slane %v404, 1
      %v558 = vrot.slane %v405, 1
      %v559 = vsel %vm509, %v557, %v558
      %v561 = vsel %vm509, %v558, 0.0
      %v564 = vrot.slane %v442, 7
      %v565 = vrot.slane %v443, 7
      %v566 = vsel %vm460, %v564, %v565
      %v568 = vsel %vm460, 0.0, %v564
      %v569 = vrot.slane %v442, 1
      %v570 = vrot.slane %v443, 1
      %v571 = vsel %vm509, %v569, %v570
      %v573 = vsel %vm509, %v570, 0.0
      %574 = vrot.lane.b32.xlu0 %v423, 16
      %v575 = vpop.permute.xlu0 %574
      %576 = vrot.lane.b32.xlu0 %v424, 16
      %v577 = vpop.permute.xlu0 %576
      %578 = vrot.lane.b32.xlu0 %v390, 16
      %v579 = vpop.permute.xlu0 %578
      %580 = vrot.lane.b32.xlu0 %v391, 16
      %v581 = vpop.permute.xlu0 %580
      %582 = vrot.lane.b32.xlu0 %v392, 16
      %v583 = vpop.permute.xlu0 %582
      %584 = vrot.lane.b32.xlu0 %v393, 16
      %v585 = vpop.permute.xlu0 %584
      %586 = vrot.lane.b32.xlu0 %v394, 16
      %v587 = vpop.permute.xlu0 %586
      %588 = vrot.lane.b32.xlu0 %v395, 16
      %v589 = vpop.permute.xlu0 %588
      %590 = vrot.lane.b32.xlu0 %v396, 16
      %v591 = vpop.permute.xlu0 %590
      %592 = vrot.lane.b32.xlu0 %v397, 16
      %v593 = vpop.permute.xlu0 %592
      %594 = vrot.lane.b32.xlu0 %v398, 16
      %v595 = vpop.permute.xlu0 %594
      %596 = vrot.lane.b32.xlu0 %v399, 16
      %v597 = vpop.permute.xlu0 %596
      %598 = vrot.lane.b32.xlu0 %v400, 16
      %v599 = vpop.permute.xlu0 %598
      %600 = vrot.lane.b32.xlu0 %v401, 16
      %v601 = vpop.permute.xlu0 %600
      %602 = vrot.lane.b32.xlu0 %v402, 16
      %v603 = vpop.permute.xlu0 %602
      %604 = vrot.lane.b32.xlu0 %v403, 16
      %v605 = vpop.permute.xlu0 %604
      %630 = vrot.lane.b32.xlu0 %v512, 32
      %v631 = vpop.permute.xlu0 %630
      %632 = vrot.lane.b32.xlu0 %v542, 32
      %v633 = vpop.permute.xlu0 %632
      %634 = vrot.lane.b32.xlu0 %v515, 32
      %v635 = vpop.permute.xlu0 %634
      %636 = vrot.lane.b32.xlu0 %v543, 32
      %v637 = vpop.permute.xlu0 %636
      %638 = vrot.lane.b32.xlu0 %v518, 32
      %v639 = vpop.permute.xlu0 %638
      %640 = vrot.lane.b32.xlu0 %v544, 32
      %v641 = vpop.permute.xlu0 %640
      %642 = vrot.lane.b32.xlu0 %v521, 32
      %v643 = vpop.permute.xlu0 %642
      %644 = vrot.lane.b32.xlu0 %v545, 32
      %v645 = vpop.permute.xlu0 %644
      %646 = vrot.lane.b32.xlu0 %v524, 32
      %v647 = vpop.permute.xlu0 %646
      %648 = vrot.lane.b32.xlu0 %v546, 32
      %v649 = vpop.permute.xlu0 %648
      %650 = vrot.lane.b32.xlu0 %v527, 32
      %v651 = vpop.permute.xlu0 %650
      %652 = vrot.lane.b32.xlu0 %v547, 32
      %v653 = vpop.permute.xlu0 %652
      %654 = vrot.lane.b32.xlu0 %v530, 32
      %v655 = vpop.permute.xlu0 %654
      %656 = vrot.lane.b32.xlu0 %v548, 32
      %v657 = vpop.permute.xlu0 %656
      %658 = vrot.lane.b32.xlu0 %v533, 32
      %v659 = vpop.permute.xlu0 %658
      %660 = vrot.lane.b32.xlu0 %v549, 32
      %v661 = vpop.permute.xlu0 %660
      %686 = vrot.lane.b32.xlu0 %v502, 48
      %v687 = vpop.permute.xlu0 %686
      %688 = vrot.lane.b32.xlu0 %v466, 48
      %v689 = vpop.permute.xlu0 %688
      %690 = vrot.lane.b32.xlu0 %v503, 48
      %v691 = vpop.permute.xlu0 %690
      %692 = vrot.lane.b32.xlu0 %v469, 48
      %v693 = vpop.permute.xlu0 %692
      %694 = vrot.lane.b32.xlu0 %v504, 48
      %v695 = vpop.permute.xlu0 %694
      %696 = vrot.lane.b32.xlu0 %v472, 48
      %v697 = vpop.permute.xlu0 %696
      %698 = vrot.lane.b32.xlu0 %v505, 48
      %v699 = vpop.permute.xlu0 %698
      %700 = vrot.lane.b32.xlu0 %v475, 48
      %v701 = vpop.permute.xlu0 %700
      %702 = vrot.lane.b32.xlu0 %v506, 48
      %v703 = vpop.permute.xlu0 %702
      %704 = vrot.lane.b32.xlu0 %v478, 48
      %v705 = vpop.permute.xlu0 %704
      %706 = vrot.lane.b32.xlu0 %v507, 48
      %v707 = vpop.permute.xlu0 %706
      %708 = vrot.lane.b32.xlu0 %v481, 48
      %v709 = vpop.permute.xlu0 %708
      %710 = vrot.lane.b32.xlu0 %v508, 48
      %v711 = vpop.permute.xlu0 %710
      %712 = vrot.lane.b32.xlu0 %v484, 48
      %v713 = vpop.permute.xlu0 %712
      %714 = vrot.lane.b32.xlu0 %v556, 48
      %v715 = vpop.permute.xlu0 %714
      %716 = vrot.lane.b32.xlu0 %v554, 48
      %v717 = vpop.permute.xlu0 %716
      %734 = vrot.lane.b32.xlu0 %v390, 64
      %v735 = vpop.permute.xlu0 %734
      %736 = vrot.lane.b32.xlu0 %v391, 64
      %v737 = vpop.permute.xlu0 %736
      %738 = vrot.lane.b32.xlu0 %v392, 64
      %v739 = vpop.permute.xlu0 %738
      %740 = vrot.lane.b32.xlu0 %v393, 64
      %v741 = vpop.permute.xlu0 %740
      %742 = vrot.lane.b32.xlu0 %v394, 64
      %v743 = vpop.permute.xlu0 %742
      %744 = vrot.lane.b32.xlu0 %v395, 64
      %v745 = vpop.permute.xlu0 %744
      %746 = vrot.lane.b32.xlu0 %v396, 64
      %v747 = vpop.permute.xlu0 %746
      %748 = vrot.lane.b32.xlu0 %v397, 64
      %v749 = vpop.permute.xlu0 %748
      %750 = vrot.lane.b32.xlu0 %v398, 64
      %v751 = vpop.permute.xlu0 %750
      %752 = vrot.lane.b32.xlu0 %v399, 64
      %v753 = vpop.permute.xlu0 %752
      %754 = vrot.lane.b32.xlu0 %v400, 64
      %v755 = vpop.permute.xlu0 %754
      %756 = vrot.lane.b32.xlu0 %v401, 64
      %v757 = vpop.permute.xlu0 %756
      %758 = vrot.lane.b32.xlu0 %v402, 64
      %v759 = vpop.permute.xlu0 %758
      %760 = vrot.lane.b32.xlu0 %v403, 64
      %v761 = vpop.permute.xlu0 %760
      %762 = vrot.lane.b32.xlu0 %v404, 64
      %v763 = vpop.permute.xlu0 %762
      %764 = vrot.lane.b32.xlu0 %v405, 64
      %v765 = vpop.permute.xlu0 %764
      %783 = vrot.lane.b32.xlu0 %v515, 80
      %v784 = vpop.permute.xlu0 %783
      %785 = vrot.lane.b32.xlu0 %v543, 80
      %v786 = vpop.permute.xlu0 %785
      %787 = vrot.lane.b32.xlu0 %v518, 80
      %v788 = vpop.permute.xlu0 %787
      %789 = vrot.lane.b32.xlu0 %v544, 80
      %v790 = vpop.permute.xlu0 %789
      %791 = vrot.lane.b32.xlu0 %v521, 80
      %v792 = vpop.permute.xlu0 %791
      %793 = vrot.lane.b32.xlu0 %v545, 80
      %v794 = vpop.permute.xlu0 %793
      %795 = vrot.lane.b32.xlu0 %v524, 80
      %v796 = vpop.permute.xlu0 %795
      %797 = vrot.lane.b32.xlu0 %v546, 80
      %v798 = vpop.permute.xlu0 %797
      %799 = vrot.lane.b32.xlu0 %v527, 80
      %v800 = vpop.permute.xlu0 %799
      %801 = vrot.lane.b32.xlu0 %v547, 80
      %v802 = vpop.permute.xlu0 %801
      %803 = vrot.lane.b32.xlu0 %v530, 80
      %v804 = vpop.permute.xlu0 %803
      %805 = vrot.lane.b32.xlu0 %v548, 80
      %v806 = vpop.permute.xlu0 %805
      %807 = vrot.lane.b32.xlu0 %v533, 80
      %v808 = vpop.permute.xlu0 %807
      %809 = vrot.lane.b32.xlu0 %v549, 80
      %v810 = vpop.permute.xlu0 %809
      %811 = vrot.lane.b32.xlu0 %v559, 80
      %v812 = vpop.permute.xlu0 %811
      %813 = vrot.lane.b32.xlu0 %v561, 80
      %v814 = vpop.permute.xlu0 %813
      %832 = vrot.lane.b32.xlu0 %v503, 96
      %v833 = vpop.permute.xlu0 %832
      %834 = vrot.lane.b32.xlu0 %v469, 96
      %v835 = vpop.permute.xlu0 %834
      %836 = vrot.lane.b32.xlu0 %v504, 96
      %v837 = vpop.permute.xlu0 %836
      %838 = vrot.lane.b32.xlu0 %v472, 96
      %v839 = vpop.permute.xlu0 %838
      %840 = vrot.lane.b32.xlu0 %v505, 96
      %v841 = vpop.permute.xlu0 %840
      %842 = vrot.lane.b32.xlu0 %v475, 96
      %v843 = vpop.permute.xlu0 %842
      %844 = vrot.lane.b32.xlu0 %v506, 96
      %v845 = vpop.permute.xlu0 %844
      %846 = vrot.lane.b32.xlu0 %v478, 96
      %v847 = vpop.permute.xlu0 %846
      %848 = vrot.lane.b32.xlu0 %v507, 96
      %v849 = vpop.permute.xlu0 %848
      %850 = vrot.lane.b32.xlu0 %v481, 96
      %v851 = vpop.permute.xlu0 %850
      %852 = vrot.lane.b32.xlu0 %v508, 96
      %v853 = vpop.permute.xlu0 %852
      %854 = vrot.lane.b32.xlu0 %v484, 96
      %v855 = vpop.permute.xlu0 %854
      %856 = vrot.lane.b32.xlu0 %v556, 96
      %v857 = vpop.permute.xlu0 %856
      %858 = vrot.lane.b32.xlu0 %v554, 96
      %v859 = vpop.permute.xlu0 %858
      %860 = vrot.lane.b32.xlu0 %v568, 96
      %v861 = vpop.permute.xlu0 %860
      %862 = vrot.lane.b32.xlu0 %v566, 96
      %v863 = vpop.permute.xlu0 %862
      %880 = vrot.lane.b32.xlu0 %v392, 112
      %v881 = vpop.permute.xlu0 %880
      %882 = vrot.lane.b32.xlu0 %v393, 112
      %v883 = vpop.permute.xlu0 %882
      %884 = vrot.lane.b32.xlu0 %v394, 112
      %v885 = vpop.permute.xlu0 %884
      %886 = vrot.lane.b32.xlu0 %v395, 112
      %v887 = vpop.permute.xlu0 %886
      %888 = vrot.lane.b32.xlu0 %v396, 112
      %v889 = vpop.permute.xlu0 %888
      %890 = vrot.lane.b32.xlu0 %v397, 112
      %v891 = vpop.permute.xlu0 %890
      %892 = vrot.lane.b32.xlu0 %v398, 112
      %v893 = vpop.permute.xlu0 %892
      %894 = vrot.lane.b32.xlu0 %v399, 112
      %v895 = vpop.permute.xlu0 %894
      %896 = vrot.lane.b32.xlu0 %v400, 112
      %v897 = vpop.permute.xlu0 %896
      %898 = vrot.lane.b32.xlu0 %v401, 112
      %v899 = vpop.permute.xlu0 %898
      %900 = vrot.lane.b32.xlu0 %v402, 112
      %v901 = vpop.permute.xlu0 %900
      %902 = vrot.lane.b32.xlu0 %v403, 112
      %v903 = vpop.permute.xlu0 %902
      %904 = vrot.lane.b32.xlu0 %v404, 112
      %v905 = vpop.permute.xlu0 %904
      %906 = vrot.lane.b32.xlu0 %v405, 112
      %v907 = vpop.permute.xlu0 %906
      %908 = vrot.lane.b32.xlu0 %v442, 112
      %v909 = vpop.permute.xlu0 %908
      %910 = vrot.lane.b32.xlu0 %v443, 112
      %v911 = vpop.permute.xlu0 %910
      %vm928 = vcmask 130048
      %v929 = vsel %vm928, %v501, %v575
      %v930 = vsel %vm928, %v463, %v577
      %v931 = vsel %vm928, %v502, %v579
      %v932 = vsel %vm928, %v466, %v581
      %v933 = vsel %vm928, %v503, %v583
      %v934 = vsel %vm928, %v469, %v585
      %v935 = vsel %vm928, %v504, %v587
      %v936 = vsel %vm928, %v472, %v589
      %v937 = vsel %vm928, %v505, %v591
      %v938 = vsel %vm928, %v475, %v593
      %v939 = vsel %vm928, %v506, %v595
      %v940 = vsel %vm928, %v478, %v597
      %v941 = vsel %vm928, %v507, %v599
      %v942 = vsel %vm928, %v481, %v601
      %v943 = vsel %vm928, %v508, %v603
      %v944 = vsel %vm928, %v484, %v605
      %vm945 = vcmask 261120
      %v946 = vsel %vm945, %v929, %v631
      %v947 = vsel %vm945, %v930, %v633
      %v948 = vsel %vm945, %v931, %v635
      %v949 = vsel %vm945, %v932, %v637
      %v950 = vsel %vm945, %v933, %v639
      %v951 = vsel %vm945, %v934, %v641
      %v952 = vsel %vm945, %v935, %v643
      %v953 = vsel %vm945, %v936, %v645
      %v954 = vsel %vm945, %v937, %v647
      %v955 = vsel %vm945, %v938, %v649
      %v956 = vsel %vm945, %v939, %v651
      %v957 = vsel %vm945, %v940, %v653
      %v958 = vsel %vm945, %v941, %v655
      %v959 = vsel %vm945, %v942, %v657
      %v960 = vsel %vm945, %v943, %v659
      %v961 = vsel %vm945, %v944, %v661
      %vm962 = vcmask 392192
      %v963 = vsel %vm962, %v946, %v687
      %v964 = vsel %vm962, %v947, %v689
      %v965 = vsel %vm962, %v948, %v691
      %v966 = vsel %vm962, %v949, %v693
      %v967 = vsel %vm962, %v950, %v695
      %v968 = vsel %vm962, %v951, %v697
      %v969 = vsel %vm962, %v952, %v699
      %v970 = vsel %vm962, %v953, %v701
      %v971 = vsel %vm962, %v954, %v703
      %v972 = vsel %vm962, %v955, %v705
      %v973 = vsel %vm962, %v956, %v707
      %v974 = vsel %vm962, %v957, %v709
      %v975 = vsel %vm962, %v958, %v711
      %v976 = vsel %vm962, %v959, %v713
      %v977 = vsel %vm962, %v960, %v715
      %v978 = vsel %vm962, %v961, %v717
      %vm979 = vcmask 523264
      %v980 = vsel %vm979, %v963, %v735
      %v981 = vsel %vm979, %v964, %v737
      %v982 = vsel %vm979, %v965, %v739
      %v983 = vsel %vm979, %v966, %v741
      %v984 = vsel %vm979, %v967, %v743
      %v985 = vsel %vm979, %v968, %v745
      %v986 = vsel %vm979, %v969, %v747
      %v987 = vsel %vm979, %v970, %v749
      %v988 = vsel %vm979, %v971, %v751
      %v989 = vsel %vm979, %v972, %v753
      %v990 = vsel %vm979, %v973, %v755
      %v991 = vsel %vm979, %v974, %v757
      %v992 = vsel %vm979, %v975, %v759
      %v993 = vsel %vm979, %v976, %v761
      %v994 = vsel %vm979, %v977, %v763
      %v995 = vsel %vm979, %v978, %v765
      %vm996 = vcmask 654336
      %v997 = vsel %vm996, %v980, %v784
      %v998 = vsel %vm996, %v981, %v786
      %v999 = vsel %vm996, %v982, %v788
      %v1000 = vsel %vm996, %v983, %v790
      %v1001 = vsel %vm996, %v984, %v792
      %v1002 = vsel %vm996, %v985, %v794
      %v1003 = vsel %vm996, %v986, %v796
      %v1004 = vsel %vm996, %v987, %v798
      %v1005 = vsel %vm996, %v988, %v800
      %v1006 = vsel %vm996, %v989, %v802
      %v1007 = vsel %vm996, %v990, %v804
      %v1008 = vsel %vm996, %v991, %v806
      %v1009 = vsel %vm996, %v992, %v808
      %v1010 = vsel %vm996, %v993, %v810
      %v1011 = vsel %vm996, %v994, %v812
      %v1012 = vsel %vm996, %v995, %v814
      %vm1013 = vcmask 785408
      %v1014 = vsel %vm1013, %v997, %v833
      %v1015 = vsel %vm1013, %v998, %v835
      %v1016 = vsel %vm1013, %v999, %v837
      %v1017 = vsel %vm1013, %v1000, %v839
      %v1018 = vsel %vm1013, %v1001, %v841
      %v1019 = vsel %vm1013, %v1002, %v843
      %v1020 = vsel %vm1013, %v1003, %v845
      %v1021 = vsel %vm1013, %v1004, %v847
      %v1022 = vsel %vm1013, %v1005, %v849
      %v1023 = vsel %vm1013, %v1006, %v851
      %v1024 = vsel %vm1013, %v1007, %v853
      %v1025 = vsel %vm1013, %v1008, %v855
      %v1026 = vsel %vm1013, %v1009, %v857
      %v1027 = vsel %vm1013, %v1010, %v859
      %v1028 = vsel %vm1013, %v1011, %v861
      %v1029 = vsel %vm1013, %v1012, %v863
      %vm1030 = vcmask 916480
      %v1031 = vsel %vm1030, %v1014, %v881
      %v1032 = vsel %vm1030, %v1015, %v883
      %v1033 = vsel %vm1030, %v1016, %v885
      %v1034 = vsel %vm1030, %v1017, %v887
      %v1035 = vsel %vm1030, %v1018, %v889
      %v1036 = vsel %vm1030, %v1019, %v891
      %v1037 = vsel %vm1030, %v1020, %v893
      %v1038 = vsel %vm1030, %v1021, %v895
      %v1039 = vsel %vm1030, %v1022, %v897
      %v1040 = vsel %vm1030, %v1023, %v899
      %v1041 = vsel %vm1030, %v1024, %v901
      %v1042 = vsel %vm1030, %v1025, %v903
      %v1043 = vsel %vm1030, %v1026, %v905
      %v1044 = vsel %vm1030, %v1027, %v907
      %v1045 = vsel %vm1030, %v1028, %v909
      %v1046 = vsel %vm1030, %v1029, %v911
      %v1047 = vld [vmem:[%s1] sm:$0xff]
      %v1048 = vld [vmem:[%s1 + $0x8] sm:$0xff]
      %v1049 = vld [vmem:[%s1 + $0x10] sm:$0xff]
      %v1050 = vld [vmem:[%s1 + $0x18] sm:$0xff]
      %v1051 = vld [vmem:[%s1 + $0x20] sm:$0xff]
      %v1052 = vld [vmem:[%s1 + $0x28] sm:$0xff]
      %v1053 = vld [vmem:[%s1 + $0x30] sm:$0xff]
      %v1054 = vld [vmem:[%s1 + $0x38] sm:$0xff]
      %v1055 = vld [vmem:[%s1 + $0x40] sm:$0xff]
      %v1056 = vld [vmem:[%s1 + $0x48] sm:$0xff]
      %v1057 = vld [vmem:[%s1 + $0x50] sm:$0xff]
      %v1058 = vld [vmem:[%s1 + $0x58] sm:$0xff]
      %v1059 = vld [vmem:[%s1 + $0x60] sm:$0xff]
      %v1060 = vld [vmem:[%s1 + $0x68] sm:$0xff]
      %v1061 = vld [vmem:[%s1 + $0x70] sm:$0xff]
      %v1062 = vld [vmem:[%s1 + $0x78] sm:$0xff]
      %v1063 = vld [vmem:[%s1 + $0x80] sm:$0xff]
      %v1064 = vld [vmem:[%s1 + $0x88] sm:$0xff]
      %v1065 = vsel %vm928, %v518, 0
      %v1067 = vsel %vm928, %v544, 0
      %v1069 = vsel %vm928, %v521, 0
      %v1071 = vsel %vm928, %v545, 0
      %v1073 = vsel %vm928, %v524, 0
      %v1075 = vsel %vm928, %v546, 0
      %v1077 = vsel %vm928, %v527, 0
      %v1079 = vsel %vm928, %v547, 0
      %v1081 = vsel %vm928, %v530, 0
      %v1083 = vsel %vm928, %v548, 0
      %v1085 = vsel %vm928, %v533, 0
      %v1087 = vsel %vm928, %v549, 0
      %v1089 = vsel %vm928, %v559, 0
      %v1091 = vsel %vm928, %v561, 0
      %v1093 = vsel %vm928, %v571, 0
      %v1096 = vsel %vm928, %v573, 0
      %1098 = vmatpush.msra.mxu0 %v1062
      %1099 = vmatpush.msra.mxu0 %v1061
      %1100 = vmatpush.msra.mxu0 %v1060
      %1101 = vmatpush.msra.mxu0 %v1059
      %1102 = vmatpush.msra.mxu0 %v1058
      %1103 = vmatpush.msra.mxu0 %v1057
      %1104 = vmatpush.msra.mxu0 %v1056
      %1105 = vmatpush.msra.mxu0 %v1055
      %1106 = vmatpush.msra.mxu0 %v1054
      %1107 = vmatpush.msra.mxu0 %v1053
      %1108 = vmatpush.msra.mxu0 %v1052
      %1109 = vmatpush.msra.mxu0 %v1051
      %1110 = vmatpush.msra.mxu0 %v1050
      %1111 = vmatpush.msra.mxu0 %v1049
      %1112 = vmatpush.msra.mxu0 %v1048
      %1113 = vmatpush.msra.mxu0 %v1047
      %1114 = vmatmul.f32.gmra.mxu0 %v1031
      %v1115 = vpop.f32.mrf.mxu0
      %v1116 = vadd.f32 0.0, %v1115
      %1117 = vmatmul.f32.gmra.mxu0 %v1032
      %v1118 = vpop.f32.mrf.mxu0
      %v1119 = vadd.f32 0.0, %v1118
      %1120 = vmatmul.f32.gmra.mxu0 %v1033
      %v1121 = vpop.f32.mrf.mxu0
      %v1122 = vadd.f32 0.0, %v1121
      %1123 = vmatmul.f32.gmra.mxu0 %v1034
      %v1124 = vpop.f32.mrf.mxu0
      %v1125 = vadd.f32 0.0, %v1124
      %1126 = vmatmul.f32.gmra.mxu0 %v1035
      %v1127 = vpop.f32.mrf.mxu0
      %v1128 = vadd.f32 0.0, %v1127
      %1129 = vmatmul.f32.gmra.mxu0 %v1036
      %v1130 = vpop.f32.mrf.mxu0
      %v1131 = vadd.f32 0.0, %v1130
      %1132 = vmatmul.f32.gmra.mxu0 %v1037
      %v1133 = vpop.f32.mrf.mxu0
      %v1134 = vadd.f32 0.0, %v1133
      %1135 = vmatmul.f32.gmra.mxu0 %v1038
      %v1136 = vpop.f32.mrf.mxu0
      %v1137 = vadd.f32 0.0, %v1136
      %1138 = vmatmul.f32.gmra.mxu0 %v1039
      %v1139 = vpop.f32.mrf.mxu0
      %v1140 = vadd.f32 0.0, %v1139
      %1141 = vmatmul.f32.gmra.mxu0 %v1040
      %v1142 = vpop.f32.mrf.mxu0
      %v1143 = vadd.f32 0.0, %v1142
      %1144 = vmatmul.f32.gmra.mxu0 %v1041
      %v1145 = vpop.f32.mrf.mxu0
      %v1146 = vadd.f32 0.0, %v1145
      %1147 = vmatmul.f32.gmra.mxu0 %v1042
      %v1148 = vpop.f32.mrf.mxu0
      %v1149 = vadd.f32 0.0, %v1148
      %1150 = vmatmul.f32.gmra.mxu0 %v1043
      %v1151 = vpop.f32.mrf.mxu0
      %v1152 = vadd.f32 0.0, %v1151
      %1153 = vmatmul.f32.gmra.mxu0 %v1044
      %v1154 = vpop.f32.mrf.mxu0
      %v1155 = vadd.f32 0.0, %v1154
      %1156 = vmatmul.f32.gmra.mxu0 %v1045
      %v1157 = vpop.f32.mrf.mxu0
      %v1158 = vadd.f32 0.0, %v1157
      %1159 = vmatmul.f32.gmra.mxu0 %v1046
      %v1160 = vpop.f32.mrf.mxu0
      %v1161 = vadd.f32 0.0, %v1160
      %1162 = vdwg.mxu0
      %1163 = vmatpush.msra.mxu0 0.0
      %1164 = vmatpush.msra.mxu0 0.0
      %1165 = vmatpush.msra.mxu0 0.0
      %1166 = vmatpush.msra.mxu0 0.0
      %1167 = vmatpush.msra.mxu0 0.0
      %1168 = vmatpush.msra.mxu0 0.0
      %1169 = vmatpush.msra.mxu0 0.0
      %1170 = vmatpush.msra.mxu0 0.0
      %1171 = vmatpush.msra.mxu0 0.0
      %1172 = vmatpush.msra.mxu0 0.0
      %1173 = vmatpush.msra.mxu0 0.0
      %1174 = vmatpush.msra.mxu0 0.0
      %1175 = vmatpush.msra.mxu0 0.0
      %1176 = vmatpush.msra.mxu0 0.0
      %1177 = vmatpush.msra.mxu0 %v1064
      %1178 = vmatpush.msra.mxu0 %v1063
      %1179 = vmatmul.f32.gmra.mxu0 %v1065
      %v1180 = vpop.f32.mrf.mxu0
      %v1181 = vadd.f32 %v1116, %v1180
      %1182 = vmatmul.f32.gmra.mxu0 %v1067
      %v1183 = vpop.f32.mrf.mxu0
      %v1184 = vadd.f32 %v1119, %v1183
      %1185 = vmatmul.f32.gmra.mxu0 %v1069
      %v1186 = vpop.f32.mrf.mxu0
      %v1187 = vadd.f32 %v1122, %v1186
      %1188 = vmatmul.f32.gmra.mxu0 %v1071
      %v1189 = vpop.f32.mrf.mxu0
      %v1190 = vadd.f32 %v1125, %v1189
      %1191 = vmatmul.f32.gmra.mxu0 %v1073
      %v1192 = vpop.f32.mrf.mxu0
      %v1193 = vadd.f32 %v1128, %v1192
      %1194 = vmatmul.f32.gmra.mxu0 %v1075
      %v1195 = vpop.f32.mrf.mxu0
      %v1196 = vadd.f32 %v1131, %v1195
      %1197 = vmatmul.f32.gmra.mxu0 %v1077
      %v1198 = vpop.f32.mrf.mxu0
      %v1199 = vadd.f32 %v1134, %v1198
      %1200 = vmatmul.f32.gmra.mxu0 %v1079
      %v1201 = vpop.f32.mrf.mxu0
      %v1202 = vadd.f32 %v1137, %v1201
      %1203 = vmatmul.f32.gmra.mxu0 %v1081
      %v1204 = vpop.f32.mrf.mxu0
      %v1205 = vadd.f32 %v1140, %v1204
      %1206 = vmatmul.f32.gmra.mxu0 %v1083
      %v1207 = vpop.f32.mrf.mxu0
      %v1208 = vadd.f32 %v1143, %v1207
      %1209 = vmatmul.f32.gmra.mxu0 %v1085
      %v1210 = vpop.f32.mrf.mxu0
      %v1211 = vadd.f32 %v1146, %v1210
      %1212 = vmatmul.f32.gmra.mxu0 %v1087
      %v1213 = vpop.f32.mrf.mxu0
      %v1214 = vadd.f32 %v1149, %v1213
      %1215 = vmatmul.f32.gmra.mxu0 %v1089
      %v1216 = vpop.f32.mrf.mxu0
      %v1217 = vadd.f32 %v1152, %v1216
      %1218 = vmatmul.f32.gmra.mxu0 %v1091
      %v1219 = vpop.f32.mrf.mxu0
      %v1220 = vadd.f32 %v1155, %v1219
      %1221 = vmatmul.f32.gmra.mxu0 %v1093
      %v1222 = vpop.f32.mrf.mxu0
      %v1223 = vadd.f32 %v1158, %v1222
      %1224 = vmatmul.f32.gmra.mxu0 %v1096
      %v1225 = vpop.f32.mrf.mxu0
      %v1226 = vadd.f32 %v1161, %v1225
      %1227 = vdwg.mxu0
      %v1228 = vld [vmem:[%s4] sm:$0x1]
      %v1230 = vperm.slane %v1228, 0
      %v1232 = vmul.f32 %v1181, %v1230
      %v1233 = vmul.f32 %v1184, %v1230
      %v1234 = vmul.f32 %v1187, %v1230
      %v1235 = vmul.f32 %v1190, %v1230
      %v1236 = vmul.f32 %v1193, %v1230
      %v1237 = vmul.f32 %v1196, %v1230
      %v1238 = vmul.f32 %v1199, %v1230
      %v1239 = vmul.f32 %v1202, %v1230
      %v1240 = vmul.f32 %v1205, %v1230
      %v1241 = vmul.f32 %v1208, %v1230
      %v1242 = vmul.f32 %v1211, %v1230
      %v1243 = vmul.f32 %v1214, %v1230
      %v1244 = vmul.f32 %v1217, %v1230
      %v1245 = vmul.f32 %v1220, %v1230
      %v1246 = vmul.f32 %v1223, %v1230
      %v1247 = vmul.f32 %v1226, %v1230
      %v1248 = vld [vmem:[%s5] sm:$0x1]
      %v1250 = vperm.slane %v1248, 0
      %v1252 = vadd.f32 %v1232, %v1250
      %v1253 = vadd.f32 %v1233, %v1250
      %v1254 = vadd.f32 %v1234, %v1250
      %v1255 = vadd.f32 %v1235, %v1250
      %v1256 = vadd.f32 %v1236, %v1250
      %v1257 = vadd.f32 %v1237, %v1250
      %v1258 = vadd.f32 %v1238, %v1250
      %v1259 = vadd.f32 %v1239, %v1250
      %v1260 = vadd.f32 %v1240, %v1250
      %v1261 = vadd.f32 %v1241, %v1250
      %v1262 = vadd.f32 %v1242, %v1250
      %v1263 = vadd.f32 %v1243, %v1250
      %v1264 = vadd.f32 %v1244, %v1250
      %v1265 = vadd.f32 %v1245, %v1250
      %v1266 = vadd.f32 %v1246, %v1250
      %v1267 = vadd.f32 %v1247, %v1250
      %v1268 = vmax.f32 %v1252, 0.0
      %v1269 = vmax.f32 %v1253, 0.0
      %v1270 = vmax.f32 %v1254, 0.0
      %v1271 = vmax.f32 %v1255, 0.0
      %v1272 = vmax.f32 %v1256, 0.0
      %v1273 = vmax.f32 %v1257, 0.0
      %v1274 = vmax.f32 %v1258, 0.0
      %v1275 = vmax.f32 %v1259, 0.0
      %v1276 = vmax.f32 %v1260, 0.0
      %v1277 = vmax.f32 %v1261, 0.0
      %v1278 = vmax.f32 %v1262, 0.0
      %v1279 = vmax.f32 %v1263, 0.0
      %v1280 = vmax.f32 %v1264, 0.0
      %v1281 = vmax.f32 %v1265, 0.0
      %v1282 = vmax.f32 %v1266, 0.0
      %v1283 = vmax.f32 %v1267, 0.0
      %v1284 = vld [vmem:[%s6] sm:$0xff]
      %v1285 = vld [vmem:[%s6 + $0x8] sm:$0xff]
      %v1286 = vld [vmem:[%s6 + $0x10] sm:$0xff]
      %v1287 = vld [vmem:[%s6 + $0x18] sm:$0xff]
      %v1288 = vld [vmem:[%s6 + $0x20] sm:$0xff]
      %v1289 = vld [vmem:[%s6 + $0x28] sm:$0xff]
      %v1290 = vld [vmem:[%s6 + $0x30] sm:$0xff]
      %v1291 = vld [vmem:[%s6 + $0x38] sm:$0xff]
      %v1292 = vld [vmem:[%s6 + $0x40] sm:$0xff]
      %v1293 = vld [vmem:[%s6 + $0x48] sm:$0xff]
      %v1294 = vld [vmem:[%s6 + $0x50] sm:$0xff]
      %v1295 = vld [vmem:[%s6 + $0x58] sm:$0xff]
      %v1296 = vld [vmem:[%s6 + $0x60] sm:$0xff]
      %v1297 = vld [vmem:[%s6 + $0x68] sm:$0xff]
      %v1298 = vld [vmem:[%s6 + $0x70] sm:$0xff]
      %v1299 = vld [vmem:[%s6 + $0x78] sm:$0xff]
      %v1300 = vld [vmem:[%s7] sm:$0x1]
      %v1302 = vperm.slane %v1300, 0
      %1304 = vmatpush.msra.mxu0 %v1299
      %1305 = vmatpush.msra.mxu0 %v1298
      %1306 = vmatpush.msra.mxu0 %v1297
      %1307 = vmatpush.msra.mxu0 %v1296
      %1308 = vmatpush.msra.mxu0 %v1295
      %1309 = vmatpush.msra.mxu0 %v1294
      %1310 = vmatpush.msra.mxu0 %v1293
      %1311 = vmatpush.msra.mxu0 %v1292
      %1312 = vmatpush.msra.mxu0 %v1291
      %1313 = vmatpush.msra.mxu0 %v1290
      %1314 = vmatpush.msra.mxu0 %v1289
      %1315 = vmatpush.msra.mxu0 %v1288
      %1316 = vmatpush.msra.mxu0 %v1287
      %1317 = vmatpush.msra.mxu0 %v1286
      %1318 = vmatpush.msra.mxu0 %v1285
      %1319 = vmatpush.msra.mxu0 %v1284
      %1320 = vmatmul.f32.gmra.mxu0 %v1268
      %v1321 = vpop.f32.mrf.mxu0
      %v1322 = vadd.f32 %v1302, %v1321
      %1323 = vmatmul.f32.gmra.mxu0 %v1269
      %v1324 = vpop.f32.mrf.mxu0
      %v1325 = vadd.f32 %v1302, %v1324
      %1326 = vmatmul.f32.gmra.mxu0 %v1270
      %v1327 = vpop.f32.mrf.mxu0
      %v1328 = vadd.f32 %v1302, %v1327
      %1329 = vmatmul.f32.gmra.mxu0 %v1271
      %v1330 = vpop.f32.mrf.mxu0
      %v1331 = vadd.f32 %v1302, %v1330
      %1332 = vmatmul.f32.gmra.mxu0 %v1272
      %v1333 = vpop.f32.mrf.mxu0
      %v1334 = vadd.f32 %v1302, %v1333
      %1335 = vmatmul.f32.gmra.mxu0 %v1273
      %v1336 = vpop.f32.mrf.mxu0
      %v1337 = vadd.f32 %v1302, %v1336
      %1338 = vmatmul.f32.gmra.mxu0 %v1274
      %v1339 = vpop.f32.mrf.mxu0
      %v1340 = vadd.f32 %v1302, %v1339
      %1341 = vmatmul.f32.gmra.mxu0 %v1275
      %v1342 = vpop.f32.mrf.mxu0
      %v1343 = vadd.f32 %v1302, %v1342
      %1344 = vmatmul.f32.gmra.mxu0 %v1276
      %v1345 = vpop.f32.mrf.mxu0
      %v1346 = vadd.f32 %v1302, %v1345
      %1347 = vmatmul.f32.gmra.mxu0 %v1277
      %v1348 = vpop.f32.mrf.mxu0
      %v1349 = vadd.f32 %v1302, %v1348
      %1350 = vmatmul.f32.gmra.mxu0 %v1278
      %v1351 = vpop.f32.mrf.mxu0
      %v1352 = vadd.f32 %v1302, %v1351
      %1353 = vmatmul.f32.gmra.mxu0 %v1279
      %v1354 = vpop.f32.mrf.mxu0
      %v1355 = vadd.f32 %v1302, %v1354
      %1356 = vmatmul.f32.gmra.mxu0 %v1280
      %v1357 = vpop.f32.mrf.mxu0
      %v1358 = vadd.f32 %v1302, %v1357
      %1359 = vmatmul.f32.gmra.mxu0 %v1281
      %v1360 = vpop.f32.mrf.mxu0
      %v1361 = vadd.f32 %v1302, %v1360
      %1362 = vmatmul.f32.gmra.mxu0 %v1282
      %v1363 = vpop.f32.mrf.mxu0
      %v1364 = vadd.f32 %v1302, %v1363
      %1365 = vmatmul.f32.gmra.mxu0 %v1283
      %v1366 = vpop.f32.mrf.mxu0
      %v1367 = vadd.f32 %v1302, %v1366
      %1368 = vdwg.mxu0
      %vm1369 = vcmask 64512
      %1370 = vst.msk [vmem:[%s329] sm:$0xff] %vm1369, %v1322
      %1371 = vst.msk [vmem:[%s329 + $0x8] sm:$0xff] %vm1369, %v1325
      %1372 = vst.msk [vmem:[%s329 + $0x10] sm:$0xff] %vm1369, %v1328
      %1373 = vst.msk [vmem:[%s329 + $0x18] sm:$0xff] %vm1369, %v1331
      %1374 = vst.msk [vmem:[%s329 + $0x20] sm:$0xff] %vm1369, %v1334
      %1375 = vst.msk [vmem:[%s329 + $0x28] sm:$0xff] %vm1369, %v1337
      %1376 = vst.msk [vmem:[%s329 + $0x30] sm:$0xff] %vm1369, %v1340
      %1377 = vst.msk [vmem:[%s329 + $0x38] sm:$0xff] %vm1369, %v1343
      %1378 = vst.msk [vmem:[%s329 + $0x40] sm:$0xff] %vm1369, %v1346
      %1379 = vst.msk [vmem:[%s329 + $0x48] sm:$0xff] %vm1369, %v1349
      %1380 = vst.msk [vmem:[%s329 + $0x50] sm:$0xff] %vm1369, %v1352
      %1381 = vst.msk [vmem:[%s329 + $0x58] sm:$0xff] %vm1369, %v1355
      %1382 = vst.msk [vmem:[%s329 + $0x60] sm:$0xff] %vm1369, %v1358
      %1383 = vst.msk [vmem:[%s329 + $0x68] sm:$0xff] %vm1369, %v1361
      %1384 = vst.msk [vmem:[%s329 + $0x70] sm:$0xff] %vm1369, %v1364
      %1385 = vst.msk [vmem:[%s329 + $0x78] sm:$0xff] %vm1369, %v1367
      %s1386 = smul.u32 8, %s24
      %p1387 = scmp.lt.s32.totalorder %s23, 1
      %s1388 = scalar_select %p1387, %s23, 1
      %p1389 = scmp.lt.s32.totalorder %s1386, 15
      %s1390 = scalar_select %p1389, %s1386, 15
      %s1391 = smul.addr %s1390, 2
      %s1392 = smul.addr %s1388, 32
      %s1393 = sadd.s32 %s1391, %s1392
      %s1394 = smul.addr %s1393, 8
      %s1395 = scalar_lea.vmem %s8, %s1394
      // Predicated region
      $region53: #{segmenthead_forward.1} parent=51 // pred_check
        %p1396 = pneg %p224
      $region54: #{segmenthead_forward.1} parent=51 // pred_check_branch
        %1398 = sbr.rel (%p1396) target = $region56
      $region55: #{segmenthead_forward.1} parent=51 // pred_region
        %s1399 = smul.u32 8, %s24
      $region56: #{segmenthead_forward.1} parent=51 // pred_fallthru
        _
    $region52: #{segmenthead_forward.1} parent=5 // pred_fallthru
      _
    %p1400 = scmp.le.s32.totalorder 2, %s14
    // Predicated region
    $region57: #{segmenthead_forward.1} parent=5 // pred_check
      %p1401 = pneg %p1400
    $region58: #{segmenthead_forward.1} parent=5 // pred_check_branch
      %1403 = sbr.rel (%p1401) target = $region60
    $region59: #{segmenthead_forward.1} parent=5 // pred_region
      %s1404 = ssub.s32 %s14, 2
      // Predicated region
      $region61: #{segmenthead_forward.1} parent=59 // pred_check
        %p1405 = pneg %p230
      $region62: #{segmenthead_forward.1} parent=59 // pred_check_branch
        %1407 = sbr.rel (%p1405) target = $region64
      $region63: #{segmenthead_forward.1} parent=59 // pred_region
        %s1408 = smul.u32 8, %s26
        %p1409 = scmp.lt.s32.totalorder %s25, 1
        %s1410 = scalar_select %p1409, %s25, 1
        %p1411 = scmp.lt.s32.totalorder %s1408, 15
        %s1412 = scalar_select %p1411, %s1408, 15
        %s1413 = smul.addr %s1412, 2
        %s1414 = smul.addr %s1410, 32
        %s1415 = sadd.s32 %s1413, %s1414
        %s1416 = smul.addr %s1415, 8
        %s1417 = scalar_lea.vmem %s8, %s1416
      $region64: #{segmenthead_forward.1} parent=59 // pred_fallthru
        _
    $region60: #{segmenthead_forward.1} parent=5 // pred_fallthru
      _
  $region6: #{segmenthead_forward.1} parent=0 // loop_footer
    %s18 = sadd.s32 1, %s14
  $region7: #{segmenthead_forward.1} parent=0 // loop_footer_branch
    %13 = sbr.rel target = $region3
  $region8: #{segmenthead_forward.1} parent=0 // loop_exit
    _

</llo_original>
